<compile_context>
chip_gen: v7x
topology: tpu7x:2x2x1
jax: 0.10.0
libtpu: 0.0.40
codegen_flags: <defaults>
</compile_context>

<pallas_src>
import functools

import jax
import jax.numpy as jnp
from jax import lax
from jax.experimental import pallas as pl
from jax.experimental.pallas import tpu as pltpu

_EPS_SQ = 1e-24  # (F.normalize eps = 1e-12) ** 2


def _sparse_sim_kernel(x_ref, yn_ref, vals_ref, idx_ref,
                       xn_scr, cand_v, cand_i,
                       *, inv_tau, k, n_y_valid, tile_n, mask_tail):
    """One feat_x row tile against one streamed chunk of (pre-normalized) feat_y.

    Grid: (num_x_tiles [parallel], num_y_chunks [arbitrary]).
      x_ref   : (TM, C)       raw feat_x rows (block resident across the Ny axis)
      yn_ref  : (TN, C)  bf16 L2-normalized feat_y chunk (streamed / double-buffered)
      vals_ref: (k, TM)  f32  softmax(top-k sim / tau)   (written at the last chunk)
      idx_ref : (k, TM)  i32  top-k feat_y row indices   (written at the last chunk)
      xn_scr  : (TM, C)  bf16 normalized & 1/tau-scaled x tile (computed at j==0)
      cand_v  : (2k, TM) f32  rows [0:k) running top-k values, rows [k:2k) chunk-local
      cand_i  : (2k, TM) f32  matching feat_y row ids (exact integers in f32)
    """
    j = pl.program_id(1)
    n_chunks = pl.num_programs(1)
    neg_inf = jnp.float32(-jnp.inf)
    big_idx = jnp.float32(3e38)
    tm = cand_v.shape[1]

    @pl.when(j == 0)
    def _init():
        # Normalize the x tile once per row tile; fold 1/tau into the scale.
        xf = x_ref[...].astype(jnp.float32)
        x_scale = lax.rsqrt(
            jnp.maximum(jnp.sum(xf * xf, axis=-1, keepdims=True), _EPS_SQ))
        xn_scr[...] = (xf * (x_scale * inv_tau)).astype(jnp.bfloat16)
        # Running top-k sentinel: -inf values, distinct negative ids (never selected
        # while >= k finite candidates exist; distinctness keeps id-masking exact).
        cand_v[pl.ds(0, k), :] = jnp.full((k, tm), neg_inf, jnp.float32)
        cand_i[pl.ds(0, k), :] = -(
            lax.broadcasted_iota(jnp.int32, (k, tm), 0).astype(jnp.float32) + 1.0)

    # Cosine similarity / tau for this chunk, transposed: (TN, TM).
    # NT contraction, bf16 operands (MXU-native), f32 accumulation.
    sim = lax.dot_general(
        yn_ref[...], xn_scr[...],
        dimension_numbers=(((1,), (1,)), ((), ())),
        preferred_element_type=jnp.float32)

    # Global feat_y row ids for this chunk (exact integers in f32 for Ny < 2**24).
    chunk_ids = (j * tile_n
                 + lax.broadcasted_iota(jnp.int32, sim.shape, 0)).astype(jnp.float32)
    if mask_tail:  # static: only emitted when Ny was padded to a chunk multiple
        sim = jnp.where(chunk_ids < jnp.float32(n_y_valid), sim, neg_inf)

    # --- chunk-local top-k -> candidate rows [k:2k) (written in place) ---
    work, work_ids = sim, chunk_ids
    for s in range(k):
        m = jnp.max(work, axis=0, keepdims=True)                       # (1, TM)
        idx = jnp.min(jnp.where(work == m, work_ids, big_idx),
                      axis=0, keepdims=True)                           # (1, TM)
        cand_v[pl.ds(k + s, 1), :] = m
        cand_i[pl.ds(k + s, 1), :] = idx
        if s + 1 < k:
            work = jnp.where(work_ids == idx, neg_inf, work)

    # --- merge running ∪ chunk-local (only 2k rows, tiny) -> rows [0:k) ---
    cv, ci = cand_v[...], cand_i[...]
    for s in range(k):
        m = jnp.max(cv, axis=0, keepdims=True)
        idx = jnp.min(jnp.where(cv == m, ci, big_idx), axis=0, keepdims=True)
        cand_v[pl.ds(s, 1), :] = m
        cand_i[pl.ds(s, 1), :] = idx
        if s + 1 < k:
            cv = jnp.where(ci == idx, neg_inf, cv)

    @pl.when(j == n_chunks - 1)
    def _finalize():
        topv = cand_v[pl.ds(0, k), :]
        topi = cand_i[pl.ds(0, k), :]
        mx = jnp.max(topv, axis=0, keepdims=True)
        e = jnp.exp(topv - mx)
        denom = jnp.sum(e, axis=0, keepdims=True)
        vals_ref[...] = e / denom             # exact divide: denom is only (1, TM)
        idx_ref[...] = topi.astype(jnp.int32)


def _round_up(a, b):
    return -(-a // b) * b


def _device_kind():
    try:
        return jax.devices()[0].device_kind.lower()
    except Exception:
        return ""


def _default_tile_m():
    kind = _device_kind()
    # v5e prefers 128-row tiles; v6e / v7x are comfortable at 256 (safe with chunking).
    return 128 if "v5" in kind else 256


def _default_vmem_limit():
    kind = _device_kind()
    if "v7" in kind:
        return 48 * 1024 * 1024   # 64 MiB physical; leave headroom for Mosaic scratch
    if "v6" in kind:
        return 96 * 1024 * 1024   # 128 MiB physical
    if "v5" in kind:
        return 64 * 1024 * 1024   # 128 MiB physical; raise over the 16 MiB default
    return None                   # unknown generation: keep the compiler default


def sparse_similarity(feat_x, feat_y=None, *, tau=0.05, k_neighbors=10,
                      tile_m=None, tile_n=None):
    """Equivalent of A100OptimizedSparseSimilarity.forward (hard=False).

    feat_x: [1, Nx, C], feat_y: [1, Ny, C] or None.
    Returns (crow_indices, col_indices, values, (Nx, Ny)) — a CSR triple over the
    (Nx, Ny) similarity matrix, mirroring torch .coalesce().to_sparse_csr().
    """
    assert feat_x.ndim == 3 and feat_x.shape[0] == 1, "Input must be [1, Nx, C]"
    if feat_y is None:
        feat_y = feat_x
    k = int(k_neighbors)

    x = feat_x[0]                                   # (Nx, C)
    n_x, c = x.shape
    n_y = feat_y.shape[1]
    if n_y < k:
        raise ValueError(f"Ny={n_y} must be >= k_neighbors={k}")
    if n_y >= (1 << 24):
        # Indices are carried as exact integers in f32 inside the kernel.
        raise ValueError(f"Ny={n_y} too large for f32-exact indices (< 2**24)")

    if tile_m is None:
        tile_m = _default_tile_m()
    tile_m = max(128, min(tile_m, _round_up(n_x, 128)))
    if tile_n is None:
        tile_n = 1024                                # stream Ny in ~1K-row chunks
    tile_n = max(_round_up(k, 8), min(tile_n, _round_up(n_y, 8)))

    n_x_pad = _round_up(n_x, tile_m)
    n_y_pad = _round_up(n_y, tile_n)
    mask_tail = (n_y_pad != n_y)

    # Normalize feat_y once (outside the kernel); ship it as bf16.
    yf = feat_y[0].astype(jnp.float32)
    y_scale = lax.rsqrt(
        jnp.maximum(jnp.sum(yf * yf, axis=-1, keepdims=True), _EPS_SQ))
    yn = (yf * y_scale).astype(jnp.bfloat16)         # (Ny, C)
    if n_y_pad != n_y:
        yn = jnp.pad(yn, ((0, n_y_pad - n_y), (0, 0)))
    if n_x_pad != n_x:
        x = jnp.pad(x, ((0, n_x_pad - n_x), (0, 0)))

    kernel = functools.partial(
        _sparse_sim_kernel, inv_tau=float(1.0 / tau), k=k,
        n_y_valid=int(n_y), tile_n=int(tile_n), mask_tail=bool(mask_tail))

    cp_kwargs = dict(dimension_semantics=("parallel", "arbitrary"))
    vmem_limit = _default_vmem_limit()
    if vmem_limit is not None:
        cp_kwargs["vmem_limit_bytes"] = vmem_limit

    grid = (n_x_pad // tile_m, n_y_pad // tile_n)
    vals_t, idxs_t = pl.pallas_call(
        kernel,
        out_shape=(
            jax.ShapeDtypeStruct((k, n_x_pad), jnp.float32),
            jax.ShapeDtypeStruct((k, n_x_pad), jnp.int32),
        ),
        grid_spec=pltpu.PrefetchScalarGridSpec(
            num_scalar_prefetch=0,
            grid=grid,
            in_specs=[
                pl.BlockSpec((tile_m, c), lambda i, j: (i, 0)),  # x rows, resident over j
                pl.BlockSpec((tile_n, c), lambda i, j: (j, 0)),  # streamed y chunk
            ],
            out_specs=[
                pl.BlockSpec((k, tile_m), lambda i, j: (0, i)),
                pl.BlockSpec((k, tile_m), lambda i, j: (0, i)),
            ],
            scratch_shapes=[
                pltpu.VMEM((tile_m, c), jnp.bfloat16),       # normalized/scaled x tile
                pltpu.VMEM((2 * k, tile_m), jnp.float32),    # running + chunk top-k values
                pltpu.VMEM((2 * k, tile_m), jnp.float32),    # running + chunk top-k ids
            ],
        ),
        compiler_params=pltpu.CompilerParams(**cp_kwargs),
    )(x, yn)

    # (k, Nx_pad) -> (Nx, k); drop padded rows.
    idxs = idxs_t.T[:n_x]
    vals = vals_t.T[:n_x]

    # --- plain-JAX glue: COO -> coalesce -> CSR (index bookkeeping only) ---
    # Columns within a row are distinct by construction, so coalesce == per-row sort.
    order = jnp.argsort(idxs, axis=1)
    col_indices = jnp.take_along_axis(idxs, order, axis=1).reshape(-1)
    values = jnp.take_along_axis(vals, order, axis=1).reshape(-1)
    crow_indices = jnp.arange(n_x + 1, dtype=jnp.int32) * k
    # TODO(synk): hard=True path (_convert_to_hard_assignment / scatter_max) is not
    # implemented; the module default is hard=False.
    return crow_indices, col_indices, values, (n_x, n_y)


def _check_against_reference(feat_x, feat_y, col, vals, tau, k):
    """Tie-robust semantic check against a pure-JAX reference (same bf16 numerics)."""
    n_x = feat_x.shape[1]
    xf = feat_x[0].astype(jnp.float32)
    yf = feat_y[0].astype(jnp.float32)
    xn = xf * lax.rsqrt(jnp.maximum(jnp.sum(xf * xf, -1, keepdims=True), _EPS_SQ))
    yn = yf * lax.rsqrt(jnp.maximum(jnp.sum(yf * yf, -1, keepdims=True), _EPS_SQ))
    sim = jnp.dot((xn / tau).astype(jnp.bfloat16), yn.astype(jnp.bfloat16).T,
                  preferred_element_type=jnp.float32)          # (Nx, Ny) logits
    cols = col.reshape(n_x, k)
    vals = vals.reshape(n_x, k)
    # selected columns are distinct per row
    sc = jnp.sort(cols, axis=1)
    assert bool(jnp.all(sc[:, 1:] != sc[:, :-1])), "duplicate columns in a row"
    # every selected logit must be >= the true k-th largest logit (numeric slack)
    picked = jnp.take_along_axis(sim, cols, axis=1)
    kth = jax.lax.top_k(sim, k)[0][:, -1:]
    assert bool(jnp.all(picked >= kth - 5e-3)), "a non-top-k column was selected"
    # softmax of the picked logits reproduces the returned values
    ref_soft = jax.nn.softmax(picked, axis=-1)
    assert bool(jnp.allclose(vals, ref_soft, atol=2e-3)), "softmax values mismatch"


if __name__ == "__main__":
    key = jax.random.PRNGKey(0)
    k1, k2, k3 = jax.random.split(key, 3)
    tau, k = 0.05, 10

    # --- case 1: module-default style shapes (feat_y = feat_x), single Ny chunk ---
    n_x, c = 128, 32
    feat_x = jax.random.normal(k1, (1, n_x, c), dtype=jnp.float32)
    crow, col, vals, shape = sparse_similarity(feat_x, None, tau=tau, k_neighbors=k)
    jax.block_until_ready((crow, col, vals))

    assert crow.shape == (n_x + 1,)
    assert col.shape == (n_x * k,) and vals.shape == (n_x * k,)
    row_sums = vals.reshape(n_x, k).sum(axis=1)
    assert bool(jnp.allclose(row_sums, 1.0, atol=1e-4)), "softmax rows must sum to 1"
    diag_hit = (col.reshape(n_x, k) == jnp.arange(n_x)[:, None]).any(axis=1)
    assert bool(diag_hit.all()), "each row's top-k must contain itself"
    _check_against_reference(feat_x, feat_x, col, vals, tau, k)

    # --- case 2: distinct feat_y, multiple streamed Ny chunks + ragged tail ---
    n_x2, n_y2 = 37, 300
    feat_x2 = jax.random.normal(k2, (1, n_x2, c), dtype=jnp.float32)
    feat_y2 = jax.random.normal(k3, (1, n_y2, c), dtype=jnp.float32)
    crow2, col2, vals2, _ = sparse_similarity(feat_x2, feat_y2, tau=tau,
                                              k_neighbors=k, tile_n=128)
    jax.block_until_ready((crow2, col2, vals2))
    assert bool(jnp.all(col2 >= 0)) and bool(jnp.all(col2 < n_y2)), "index out of range"
    row_sums2 = vals2.reshape(n_x2, k).sum(axis=1)
    assert bool(jnp.allclose(row_sums2, 1.0, atol=1e-4))
    _check_against_reference(feat_x2, feat_y2, col2, vals2, tau, k)

    print("KERNEL_OK")
</pallas_src>

<mosaic_0001>
module attributes {stable_mosaic.version = 11 : i64} {
  func.func @_sparse_sim_kernel(%arg0: i32, %arg1: i32, %arg2: memref<128x32xf32, #tpu.memory_space<vmem>>, %arg3: memref<128x32xbf16, #tpu.memory_space<vmem>>, %arg4: memref<10x128xf32, #tpu.memory_space<vmem>>, %arg5: memref<10x128xi32, #tpu.memory_space<vmem>>, %arg6: memref<128x32xbf16, #tpu.memory_space<vmem>>, %arg7: memref<20x128xf32, #tpu.memory_space<vmem>>, %arg8: memref<20x128xf32, #tpu.memory_space<vmem>>) attributes {dimension_semantics = [#tpu.dimension_semantics<parallel>, #tpu.dimension_semantics<arbitrary>], iteration_bounds = array<i64: 1, 1>, scalar_prefetch = 0 : i64, scratch_operands = 3 : i64, tpu.core_type = #tpu.core_type<tc>, window_params = [{transform_indices = @transform_0, window_bounds = array<i64: 128, 32>}, {transform_indices = @transform_1, window_bounds = array<i64: 128, 32>}, {transform_indices = @transform_2, window_bounds = array<i64: 10, 128>}, {transform_indices = @transform_3, window_bounds = array<i64: 10, 128>}]} {
    %c0_i32 = arith.constant 0 : i32
    %0 = arith.cmpi eq, %arg1, %c0_i32 : i32
    %1 = arith.extui %0 : i1 to i32
    %cst = arith.constant 0xFF800000 : f32
    %c0_i32_0 = arith.constant 0 : i32
    %2 = arith.cmpi ne, %1, %c0_i32_0 : i32
    scf.if %2 {
      %c0_150 = arith.constant 0 : index
      %c0_151 = arith.constant 0 : index
      %288 = vector.load %arg2[%c0_150, %c0_151] : memref<128x32xf32, #tpu.memory_space<vmem>>, vector<128x32xf32>
      %289 = arith.mulf %288, %288 : vector<128x32xf32>
      %cst_152 = arith.constant dense<0.000000e+00> : vector<128xf32>
      %290 = vector.multi_reduction <add>, %289, %cst_152 [1] : vector<128x32xf32> to vector<128xf32>
      %291 = vector.shape_cast %290 : vector<128xf32> to vector<128x1xf32>
      %cst_153 = arith.constant 1.000000e-24 : f32
      %292 = vector.broadcast %cst_153 : f32 to vector<128x1xf32>
      %293 = arith.maximumf %291, %292 : vector<128x1xf32>
      %294 = math.rsqrt %293 : vector<128x1xf32>
      %cst_154 = arith.constant 2.000000e+01 : f32
      %295 = vector.broadcast %cst_154 : f32 to vector<128x1xf32>
      %296 = arith.mulf %294, %295 : vector<128x1xf32>
      %297 = vector.broadcast %296 : vector<128x1xf32> to vector<128x32xf32>
      %298 = arith.mulf %288, %297 : vector<128x32xf32>
      %299 = arith.truncf %298 : vector<128x32xf32> to vector<128x32xbf16>
      %c0_155 = arith.constant 0 : index
      %c0_156 = arith.constant 0 : index
      %300 = vector.load %arg6[%c0_155, %c0_156] : memref<128x32xbf16, #tpu.memory_space<vmem>>, vector<128x32xbf16>
      tpu.vector_store %arg6[%c0_155, %c0_156], %299 {strides = array<i32>} : memref<128x32xbf16, #tpu.memory_space<vmem>>, vector<128x32xbf16>,
      %301 = vector.broadcast %cst : f32 to vector<10x128xf32>
      %c0_157 = arith.constant 0 : index
      %c0_158 = arith.constant 0 : index
      %302 = vector.load %arg7[%c0_157, %c0_158] : memref<20x128xf32, #tpu.memory_space<vmem>>, vector<10x128xf32>
      tpu.vector_store %arg7[%c0_157, %c0_158], %301 {strides = array<i32>} : memref<20x128xf32, #tpu.memory_space<vmem>>, vector<10x128xf32>,
      %303 = tpu.iota {dimensions = array<i32: 0>} : vector<10x128xi32>
      %304 = arith.sitofp %303 : vector<10x128xi32> to vector<10x128xf32>
      %cst_159 = arith.constant 1.000000e+00 : f32
      %305 = vector.broadcast %cst_159 : f32 to vector<10x128xf32>
      %306 = arith.addf %304, %305 : vector<10x128xf32>
      %cst_160 = arith.constant 0.000000e+00 : f32
      %307 = vector.broadcast %cst_160 : f32 to vector<10x128xf32>
      %308 = arith.subf %307, %306 : vector<10x128xf32>
      %c0_161 = arith.constant 0 : index
      %c0_162 = arith.constant 0 : index
      %309 = vector.load %arg8[%c0_161, %c0_162] : memref<20x128xf32, #tpu.memory_space<vmem>>, vector<10x128xf32>
      tpu.vector_store %arg8[%c0_161, %c0_162], %308 {strides = array<i32>} : memref<20x128xf32, #tpu.memory_space<vmem>>, vector<10x128xf32>,
    } else {
    }
    %c0 = arith.constant 0 : index
    %c0_1 = arith.constant 0 : index
    %3 = vector.load %arg3[%c0, %c0_1] : memref<128x32xbf16, #tpu.memory_space<vmem>>, vector<128x32xbf16>
    %c0_2 = arith.constant 0 : index
    %c0_3 = arith.constant 0 : index
    %4 = vector.load %arg6[%c0_2, %c0_3] : memref<128x32xbf16, #tpu.memory_space<vmem>>, vector<128x32xbf16>
    %cst_4 = arith.constant dense<0.000000e+00> : vector<128x128xf32>
    %5 = tpu.matmul %3, %4, %cst_4 {dimension_numbers = #tpu.dot_dimension_numbers<[1], [1], [0], [0], [0, 0, 1, 0], [], []>} : vector<128x32xbf16>, vector<128x32xbf16>, vector<128x128xf32> -> vector<128x128xf32>
    %c128_i32 = arith.constant 128 : i32
    %6 = arith.muli %arg1, %c128_i32 : i32
    %7 = tpu.iota {dimensions = array<i32: 0>} : vector<128x128xi32>
    %8 = vector.broadcast %6 : i32 to vector<128x128xi32>
    %9 = arith.addi %8, %7 : vector<128x128xi32>
    %10 = arith.sitofp %9 : vector<128x128xi32> to vector<128x128xf32>
    %cst_5 = arith.constant dense<0xFF800000> : vector<128xf32>
    %11 = vector.multi_reduction <maximumf>, %5, %cst_5 [0] : vector<128x128xf32> to vector<128xf32>
    %12 = vector.shape_cast %11 : vector<128xf32> to vector<1x128xf32>
    %13 = vector.broadcast %12 : vector<1x128xf32> to vector<128x128xf32>
    %14 = arith.cmpf oeq, %5, %13 : vector<128x128xf32>
    %cst_6 = arith.constant 3.000000e+38 : f32
    %15 = vector.broadcast %cst_6 : f32 to vector<128x128xf32>
    %16 = arith.select %14, %10, %15 : vector<128x128xi1>, vector<128x128xf32>
    %cst_7 = arith.constant dense<0x7F800000> : vector<128xf32>
    %17 = vector.multi_reduction <minimumf>, %16, %cst_7 [0] : vector<128x128xf32> to vector<128xf32>
    %18 = vector.shape_cast %17 : vector<128xf32> to vector<1x128xf32>
    %c10 = arith.constant 10 : index
    %c0_8 = arith.constant 0 : index
    %19 = vector.load %arg7[%c10, %c0_8] : memref<20x128xf32, #tpu.memory_space<vmem>>, vector<1x128xf32>
    tpu.vector_store %arg7[%c10, %c0_8], %12 {strides = array<i32>} : memref<20x128xf32, #tpu.memory_space<vmem>>, vector<1x128xf32>,
    %c10_9 = arith.constant 10 : index
    %c0_10 = arith.constant 0 : index
    %20 = vector.load %arg8[%c10_9, %c0_10] : memref<20x128xf32, #tpu.memory_space<vmem>>, vector<1x128xf32>
    tpu.vector_store %arg8[%c10_9, %c0_10], %18 {strides = array<i32>} : memref<20x128xf32, #tpu.memory_space<vmem>>, vector<1x128xf32>,
    %21 = vector.broadcast %18 : vector<1x128xf32> to vector<128x128xf32>
    %22 = arith.cmpf oeq, %10, %21 : vector<128x128xf32>
    %cst_11 = arith.constant 0xFF800000 : f32
    %23 = vector.broadcast %cst_11 : f32 to vector<128x128xf32>
    %24 = arith.select %22, %23, %5 : vector<128x128xi1>, vector<128x128xf32>
    %cst_12 = arith.constant dense<0xFF800000> : vector<128xf32>
    %25 = vector.multi_reduction <maximumf>, %24, %cst_12 [0] : vector<128x128xf32> to vector<128xf32>
    %26 = vector.shape_cast %25 : vector<128xf32> to vector<1x128xf32>
    %27 = vector.broadcast %26 : vector<1x128xf32> to vector<128x128xf32>
    %28 = arith.cmpf oeq, %24, %27 : vector<128x128xf32>
    %cst_13 = arith.constant 3.000000e+38 : f32
    %29 = vector.broadcast %cst_13 : f32 to vector<128x128xf32>
    %30 = arith.select %28, %10, %29 : vector<128x128xi1>, vector<128x128xf32>
    %cst_14 = arith.constant dense<0x7F800000> : vector<128xf32>
    %31 = vector.multi_reduction <minimumf>, %30, %cst_14 [0] : vector<128x128xf32> to vector<128xf32>
    %32 = vector.shape_cast %31 : vector<128xf32> to vector<1x128xf32>
    %c11 = arith.constant 11 : index
    %c0_15 = arith.constant 0 : index
    %33 = vector.load %arg7[%c11, %c0_15] : memref<20x128xf32, #tpu.memory_space<vmem>>, vector<1x128xf32>
    tpu.vector_store %arg7[%c11, %c0_15], %26 {strides = array<i32>} : memref<20x128xf32, #tpu.memory_space<vmem>>, vector<1x128xf32>,
    %c11_16 = arith.constant 11 : index
    %c0_17 = arith.constant 0 : index
    %34 = vector.load %arg8[%c11_16, %c0_17] : memref<20x128xf32, #tpu.memory_space<vmem>>, vector<1x128xf32>
    tpu.vector_store %arg8[%c11_16, %c0_17], %32 {strides = array<i32>} : memref<20x128xf32, #tpu.memory_space<vmem>>, vector<1x128xf32>,
    %35 = vector.broadcast %32 : vector<1x128xf32> to vector<128x128xf32>
    %36 = arith.cmpf oeq, %10, %35 : vector<128x128xf32>
    %cst_18 = arith.constant 0xFF800000 : f32
    %37 = vector.broadcast %cst_18 : f32 to vector<128x128xf32>
    %38 = arith.select %36, %37, %24 : vector<128x128xi1>, vector<128x128xf32>
    %cst_19 = arith.constant dense<0xFF800000> : vector<128xf32>
    %39 = vector.multi_reduction <maximumf>, %38, %cst_19 [0] : vector<128x128xf32> to vector<128xf32>
    %40 = vector.shape_cast %39 : vector<128xf32> to vector<1x128xf32>
    %41 = vector.broadcast %40 : vector<1x128xf32> to vector<128x128xf32>
    %42 = arith.cmpf oeq, %38, %41 : vector<128x128xf32>
    %cst_20 = arith.constant 3.000000e+38 : f32
    %43 = vector.broadcast %cst_20 : f32 to vector<128x128xf32>
    %44 = arith.select %42, %10, %43 : vector<128x128xi1>, vector<128x128xf32>
    %cst_21 = arith.constant dense<0x7F800000> : vector<128xf32>
    %45 = vector.multi_reduction <minimumf>, %44, %cst_21 [0] : vector<128x128xf32> to vector<128xf32>
    %46 = vector.shape_cast %45 : vector<128xf32> to vector<1x128xf32>
    %c12 = arith.constant 12 : index
    %c0_22 = arith.constant 0 : index
    %47 = vector.load %arg7[%c12, %c0_22] : memref<20x128xf32, #tpu.memory_space<vmem>>, vector<1x128xf32>
    tpu.vector_store %arg7[%c12, %c0_22], %40 {strides = array<i32>} : memref<20x128xf32, #tpu.memory_space<vmem>>, vector<1x128xf32>,
    %c12_23 = arith.constant 12 : index
    %c0_24 = arith.constant 0 : index
    %48 = vector.load %arg8[%c12_23, %c0_24] : memref<20x128xf32, #tpu.memory_space<vmem>>, vector<1x128xf32>
    tpu.vector_store %arg8[%c12_23, %c0_24], %46 {strides = array<i32>} : memref<20x128xf32, #tpu.memory_space<vmem>>, vector<1x128xf32>,
    %49 = vector.broadcast %46 : vector<1x128xf32> to vector<128x128xf32>
    %50 = arith.cmpf oeq, %10, %49 : vector<128x128xf32>
    %cst_25 = arith.constant 0xFF800000 : f32
    %51 = vector.broadcast %cst_25 : f32 to vector<128x128xf32>
    %52 = arith.select %50, %51, %38 : vector<128x128xi1>, vector<128x128xf32>
    %cst_26 = arith.constant dense<0xFF800000> : vector<128xf32>
    %53 = vector.multi_reduction <maximumf>, %52, %cst_26 [0] : vector<128x128xf32> to vector<128xf32>
    %54 = vector.shape_cast %53 : vector<128xf32> to vector<1x128xf32>
    %55 = vector.broadcast %54 : vector<1x128xf32> to vector<128x128xf32>
    %56 = arith.cmpf oeq, %52, %55 : vector<128x128xf32>
    %cst_27 = arith.constant 3.000000e+38 : f32
    %57 = vector.broadcast %cst_27 : f32 to vector<128x128xf32>
    %58 = arith.select %56, %10, %57 : vector<128x128xi1>, vector<128x128xf32>
    %cst_28 = arith.constant dense<0x7F800000> : vector<128xf32>
    %59 = vector.multi_reduction <minimumf>, %58, %cst_28 [0] : vector<128x128xf32> to vector<128xf32>
    %60 = vector.shape_cast %59 : vector<128xf32> to vector<1x128xf32>
    %c13 = arith.constant 13 : index
    %c0_29 = arith.constant 0 : index
    %61 = vector.load %arg7[%c13, %c0_29] : memref<20x128xf32, #tpu.memory_space<vmem>>, vector<1x128xf32>
    tpu.vector_store %arg7[%c13, %c0_29], %54 {strides = array<i32>} : memref<20x128xf32, #tpu.memory_space<vmem>>, vector<1x128xf32>,
    %c13_30 = arith.constant 13 : index
    %c0_31 = arith.constant 0 : index
    %62 = vector.load %arg8[%c13_30, %c0_31] : memref<20x128xf32, #tpu.memory_space<vmem>>, vector<1x128xf32>
    tpu.vector_store %arg8[%c13_30, %c0_31], %60 {strides = array<i32>} : memref<20x128xf32, #tpu.memory_space<vmem>>, vector<1x128xf32>,
    %63 = vector.broadcast %60 : vector<1x128xf32> to vector<128x128xf32>
    %64 = arith.cmpf oeq, %10, %63 : vector<128x128xf32>
    %cst_32 = arith.constant 0xFF800000 : f32
    %65 = vector.broadcast %cst_32 : f32 to vector<128x128xf32>
    %66 = arith.select %64, %65, %52 : vector<128x128xi1>, vector<128x128xf32>
    %cst_33 = arith.constant dense<0xFF800000> : vector<128xf32>
    %67 = vector.multi_reduction <maximumf>, %66, %cst_33 [0] : vector<128x128xf32> to vector<128xf32>
    %68 = vector.shape_cast %67 : vector<128xf32> to vector<1x128xf32>
    %69 = vector.broadcast %68 : vector<1x128xf32> to vector<128x128xf32>
    %70 = arith.cmpf oeq, %66, %69 : vector<128x128xf32>
    %cst_34 = arith.constant 3.000000e+38 : f32
    %71 = vector.broadcast %cst_34 : f32 to vector<128x128xf32>
    %72 = arith.select %70, %10, %71 : vector<128x128xi1>, vector<128x128xf32>
    %cst_35 = arith.constant dense<0x7F800000> : vector<128xf32>
    %73 = vector.multi_reduction <minimumf>, %72, %cst_35 [0] : vector<128x128xf32> to vector<128xf32>
    %74 = vector.shape_cast %73 : vector<128xf32> to vector<1x128xf32>
    %c14 = arith.constant 14 : index
    %c0_36 = arith.constant 0 : index
    %75 = vector.load %arg7[%c14, %c0_36] : memref<20x128xf32, #tpu.memory_space<vmem>>, vector<1x128xf32>
    tpu.vector_store %arg7[%c14, %c0_36], %68 {strides = array<i32>} : memref<20x128xf32, #tpu.memory_space<vmem>>, vector<1x128xf32>,
    %c14_37 = arith.constant 14 : index
    %c0_38 = arith.constant 0 : index
    %76 = vector.load %arg8[%c14_37, %c0_38] : memref<20x128xf32, #tpu.memory_space<vmem>>, vector<1x128xf32>
    tpu.vector_store %arg8[%c14_37, %c0_38], %74 {strides = array<i32>} : memref<20x128xf32, #tpu.memory_space<vmem>>, vector<1x128xf32>,
    %77 = vector.broadcast %74 : vector<1x128xf32> to vector<128x128xf32>
    %78 = arith.cmpf oeq, %10, %77 : vector<128x128xf32>
    %cst_39 = arith.constant 0xFF800000 : f32
    %79 = vector.broadcast %cst_39 : f32 to vector<128x128xf32>
    %80 = arith.select %78, %79, %66 : vector<128x128xi1>, vector<128x128xf32>
    %cst_40 = arith.constant dense<0xFF800000> : vector<128xf32>
    %81 = vector.multi_reduction <maximumf>, %80, %cst_40 [0] : vector<128x128xf32> to vector<128xf32>
    %82 = vector.shape_cast %81 : vector<128xf32> to vector<1x128xf32>
    %83 = vector.broadcast %82 : vector<1x128xf32> to vector<128x128xf32>
    %84 = arith.cmpf oeq, %80, %83 : vector<128x128xf32>
    %cst_41 = arith.constant 3.000000e+38 : f32
    %85 = vector.broadcast %cst_41 : f32 to vector<128x128xf32>
    %86 = arith.select %84, %10, %85 : vector<128x128xi1>, vector<128x128xf32>
    %cst_42 = arith.constant dense<0x7F800000> : vector<128xf32>
    %87 = vector.multi_reduction <minimumf>, %86, %cst_42 [0] : vector<128x128xf32> to vector<128xf32>
    %88 = vector.shape_cast %87 : vector<128xf32> to vector<1x128xf32>
    %c15 = arith.constant 15 : index
    %c0_43 = arith.constant 0 : index
    %89 = vector.load %arg7[%c15, %c0_43] : memref<20x128xf32, #tpu.memory_space<vmem>>, vector<1x128xf32>
    tpu.vector_store %arg7[%c15, %c0_43], %82 {strides = array<i32>} : memref<20x128xf32, #tpu.memory_space<vmem>>, vector<1x128xf32>,
    %c15_44 = arith.constant 15 : index
    %c0_45 = arith.constant 0 : index
    %90 = vector.load %arg8[%c15_44, %c0_45] : memref<20x128xf32, #tpu.memory_space<vmem>>, vector<1x128xf32>
    tpu.vector_store %arg8[%c15_44, %c0_45], %88 {strides = array<i32>} : memref<20x128xf32, #tpu.memory_space<vmem>>, vector<1x128xf32>,
    %91 = vector.broadcast %88 : vector<1x128xf32> to vector<128x128xf32>
    %92 = arith.cmpf oeq, %10, %91 : vector<128x128xf32>
    %cst_46 = arith.constant 0xFF800000 : f32
    %93 = vector.broadcast %cst_46 : f32 to vector<128x128xf32>
    %94 = arith.select %92, %93, %80 : vector<128x128xi1>, vector<128x128xf32>
    %cst_47 = arith.constant dense<0xFF800000> : vector<128xf32>
    %95 = vector.multi_reduction <maximumf>, %94, %cst_47 [0] : vector<128x128xf32> to vector<128xf32>
    %96 = vector.shape_cast %95 : vector<128xf32> to vector<1x128xf32>
    %97 = vector.broadcast %96 : vector<1x128xf32> to vector<128x128xf32>
    %98 = arith.cmpf oeq, %94, %97 : vector<128x128xf32>
    %cst_48 = arith.constant 3.000000e+38 : f32
    %99 = vector.broadcast %cst_48 : f32 to vector<128x128xf32>
    %100 = arith.select %98, %10, %99 : vector<128x128xi1>, vector<128x128xf32>
    %cst_49 = arith.constant dense<0x7F800000> : vector<128xf32>
    %101 = vector.multi_reduction <minimumf>, %100, %cst_49 [0] : vector<128x128xf32> to vector<128xf32>
    %102 = vector.shape_cast %101 : vector<128xf32> to vector<1x128xf32>
    %c16 = arith.constant 16 : index
    %c0_50 = arith.constant 0 : index
    %103 = vector.load %arg7[%c16, %c0_50] : memref<20x128xf32, #tpu.memory_space<vmem>>, vector<1x128xf32>
    tpu.vector_store %arg7[%c16, %c0_50], %96 {strides = array<i32>} : memref<20x128xf32, #tpu.memory_space<vmem>>, vector<1x128xf32>,
    %c16_51 = arith.constant 16 : index
    %c0_52 = arith.constant 0 : index
    %104 = vector.load %arg8[%c16_51, %c0_52] : memref<20x128xf32, #tpu.memory_space<vmem>>, vector<1x128xf32>
    tpu.vector_store %arg8[%c16_51, %c0_52], %102 {strides = array<i32>} : memref<20x128xf32, #tpu.memory_space<vmem>>, vector<1x128xf32>,
    %105 = vector.broadcast %102 : vector<1x128xf32> to vector<128x128xf32>
    %106 = arith.cmpf oeq, %10, %105 : vector<128x128xf32>
    %cst_53 = arith.constant 0xFF800000 : f32
    %107 = vector.broadcast %cst_53 : f32 to vector<128x128xf32>
    %108 = arith.select %106, %107, %94 : vector<128x128xi1>, vector<128x128xf32>
    %cst_54 = arith.constant dense<0xFF800000> : vector<128xf32>
    %109 = vector.multi_reduction <maximumf>, %108, %cst_54 [0] : vector<128x128xf32> to vector<128xf32>
    %110 = vector.shape_cast %109 : vector<128xf32> to vector<1x128xf32>
    %111 = vector.broadcast %110 : vector<1x128xf32> to vector<128x128xf32>
    %112 = arith.cmpf oeq, %108, %111 : vector<128x128xf32>
    %cst_55 = arith.constant 3.000000e+38 : f32
    %113 = vector.broadcast %cst_55 : f32 to vector<128x128xf32>
    %114 = arith.select %112, %10, %113 : vector<128x128xi1>, vector<128x128xf32>
    %cst_56 = arith.constant dense<0x7F800000> : vector<128xf32>
    %115 = vector.multi_reduction <minimumf>, %114, %cst_56 [0] : vector<128x128xf32> to vector<128xf32>
    %116 = vector.shape_cast %115 : vector<128xf32> to vector<1x128xf32>
    %c17 = arith.constant 17 : index
    %c0_57 = arith.constant 0 : index
    %117 = vector.load %arg7[%c17, %c0_57] : memref<20x128xf32, #tpu.memory_space<vmem>>, vector<1x128xf32>
    tpu.vector_store %arg7[%c17, %c0_57], %110 {strides = array<i32>} : memref<20x128xf32, #tpu.memory_space<vmem>>, vector<1x128xf32>,
    %c17_58 = arith.constant 17 : index
    %c0_59 = arith.constant 0 : index
    %118 = vector.load %arg8[%c17_58, %c0_59] : memref<20x128xf32, #tpu.memory_space<vmem>>, vector<1x128xf32>
    tpu.vector_store %arg8[%c17_58, %c0_59], %116 {strides = array<i32>} : memref<20x128xf32, #tpu.memory_space<vmem>>, vector<1x128xf32>,
    %119 = vector.broadcast %116 : vector<1x128xf32> to vector<128x128xf32>
    %120 = arith.cmpf oeq, %10, %119 : vector<128x128xf32>
    %cst_60 = arith.constant 0xFF800000 : f32
    %121 = vector.broadcast %cst_60 : f32 to vector<128x128xf32>
    %122 = arith.select %120, %121, %108 : vector<128x128xi1>, vector<128x128xf32>
    %cst_61 = arith.constant dense<0xFF800000> : vector<128xf32>
    %123 = vector.multi_reduction <maximumf>, %122, %cst_61 [0] : vector<128x128xf32> to vector<128xf32>
    %124 = vector.shape_cast %123 : vector<128xf32> to vector<1x128xf32>
    %125 = vector.broadcast %124 : vector<1x128xf32> to vector<128x128xf32>
    %126 = arith.cmpf oeq, %122, %125 : vector<128x128xf32>
    %cst_62 = arith.constant 3.000000e+38 : f32
    %127 = vector.broadcast %cst_62 : f32 to vector<128x128xf32>
    %128 = arith.select %126, %10, %127 : vector<128x128xi1>, vector<128x128xf32>
    %cst_63 = arith.constant dense<0x7F800000> : vector<128xf32>
    %129 = vector.multi_reduction <minimumf>, %128, %cst_63 [0] : vector<128x128xf32> to vector<128xf32>
    %130 = vector.shape_cast %129 : vector<128xf32> to vector<1x128xf32>
    %c18 = arith.constant 18 : index
    %c0_64 = arith.constant 0 : index
    %131 = vector.load %arg7[%c18, %c0_64] : memref<20x128xf32, #tpu.memory_space<vmem>>, vector<1x128xf32>
    tpu.vector_store %arg7[%c18, %c0_64], %124 {strides = array<i32>} : memref<20x128xf32, #tpu.memory_space<vmem>>, vector<1x128xf32>,
    %c18_65 = arith.constant 18 : index
    %c0_66 = arith.constant 0 : index
    %132 = vector.load %arg8[%c18_65, %c0_66] : memref<20x128xf32, #tpu.memory_space<vmem>>, vector<1x128xf32>
    tpu.vector_store %arg8[%c18_65, %c0_66], %130 {strides = array<i32>} : memref<20x128xf32, #tpu.memory_space<vmem>>, vector<1x128xf32>,
    %133 = vector.broadcast %130 : vector<1x128xf32> to vector<128x128xf32>
    %134 = arith.cmpf oeq, %10, %133 : vector<128x128xf32>
    %cst_67 = arith.constant 0xFF800000 : f32
    %135 = vector.broadcast %cst_67 : f32 to vector<128x128xf32>
    %136 = arith.select %134, %135, %122 : vector<128x128xi1>, vector<128x128xf32>
    %cst_68 = arith.constant dense<0xFF800000> : vector<128xf32>
    %137 = vector.multi_reduction <maximumf>, %136, %cst_68 [0] : vector<128x128xf32> to vector<128xf32>
    %138 = vector.shape_cast %137 : vector<128xf32> to vector<1x128xf32>
    %139 = vector.broadcast %138 : vector<1x128xf32> to vector<128x128xf32>
    %140 = arith.cmpf oeq, %136, %139 : vector<128x128xf32>
    %cst_69 = arith.constant 3.000000e+38 : f32
    %141 = vector.broadcast %cst_69 : f32 to vector<128x128xf32>
    %142 = arith.select %140, %10, %141 : vector<128x128xi1>, vector<128x128xf32>
    %cst_70 = arith.constant dense<0x7F800000> : vector<128xf32>
    %143 = vector.multi_reduction <minimumf>, %142, %cst_70 [0] : vector<128x128xf32> to vector<128xf32>
    %144 = vector.shape_cast %143 : vector<128xf32> to vector<1x128xf32>
    %c19 = arith.constant 19 : index
    %c0_71 = arith.constant 0 : index
    %145 = vector.load %arg7[%c19, %c0_71] : memref<20x128xf32, #tpu.memory_space<vmem>>, vector<1x128xf32>
    tpu.vector_store %arg7[%c19, %c0_71], %138 {strides = array<i32>} : memref<20x128xf32, #tpu.memory_space<vmem>>, vector<1x128xf32>,
    %c19_72 = arith.constant 19 : index
    %c0_73 = arith.constant 0 : index
    %146 = vector.load %arg8[%c19_72, %c0_73] : memref<20x128xf32, #tpu.memory_space<vmem>>, vector<1x128xf32>
    tpu.vector_store %arg8[%c19_72, %c0_73], %144 {strides = array<i32>} : memref<20x128xf32, #tpu.memory_space<vmem>>, vector<1x128xf32>,
    %c0_74 = arith.constant 0 : index
    %c0_75 = arith.constant 0 : index
    %147 = vector.load %arg7[%c0_74, %c0_75] : memref<20x128xf32, #tpu.memory_space<vmem>>, vector<20x128xf32>
    %c0_76 = arith.constant 0 : index
    %c0_77 = arith.constant 0 : index
    %148 = vector.load %arg8[%c0_76, %c0_77] : memref<20x128xf32, #tpu.memory_space<vmem>>, vector<20x128xf32>
    %cst_78 = arith.constant dense<0xFF800000> : vector<128xf32>
    %149 = vector.multi_reduction <maximumf>, %147, %cst_78 [0] : vector<20x128xf32> to vector<128xf32>
    %150 = vector.shape_cast %149 : vector<128xf32> to vector<1x128xf32>
    %151 = vector.broadcast %150 : vector<1x128xf32> to vector<20x128xf32>
    %152 = arith.cmpf oeq, %147, %151 : vector<20x128xf32>
    %cst_79 = arith.constant 3.000000e+38 : f32
    %153 = vector.broadcast %cst_79 : f32 to vector<20x128xf32>
    %154 = arith.select %152, %148, %153 : vector<20x128xi1>, vector<20x128xf32>
    %cst_80 = arith.constant dense<0x7F800000> : vector<128xf32>
    %155 = vector.multi_reduction <minimumf>, %154, %cst_80 [0] : vector<20x128xf32> to vector<128xf32>
    %156 = vector.shape_cast %155 : vector<128xf32> to vector<1x128xf32>
    %c0_81 = arith.constant 0 : index
    %c0_82 = arith.constant 0 : index
    %157 = vector.load %arg7[%c0_81, %c0_82] : memref<20x128xf32, #tpu.memory_space<vmem>>, vector<1x128xf32>
    tpu.vector_store %arg7[%c0_81, %c0_82], %150 {strides = array<i32>} : memref<20x128xf32, #tpu.memory_space<vmem>>, vector<1x128xf32>,
    %c0_83 = arith.constant 0 : index
    %c0_84 = arith.constant 0 : index
    %158 = vector.load %arg8[%c0_83, %c0_84] : memref<20x128xf32, #tpu.memory_space<vmem>>, vector<1x128xf32>
    tpu.vector_store %arg8[%c0_83, %c0_84], %156 {strides = array<i32>} : memref<20x128xf32, #tpu.memory_space<vmem>>, vector<1x128xf32>,
    %159 = vector.broadcast %156 : vector<1x128xf32> to vector<20x128xf32>
    %160 = arith.cmpf oeq, %148, %159 : vector<20x128xf32>
    %cst_85 = arith.constant 0xFF800000 : f32
    %161 = vector.broadcast %cst_85 : f32 to vector<20x128xf32>
    %162 = arith.select %160, %161, %147 : vector<20x128xi1>, vector<20x128xf32>
    %cst_86 = arith.constant dense<0xFF800000> : vector<128xf32>
    %163 = vector.multi_reduction <maximumf>, %162, %cst_86 [0] : vector<20x128xf32> to vector<128xf32>
    %164 = vector.shape_cast %163 : vector<128xf32> to vector<1x128xf32>
    %165 = vector.broadcast %164 : vector<1x128xf32> to vector<20x128xf32>
    %166 = arith.cmpf oeq, %162, %165 : vector<20x128xf32>
    %cst_87 = arith.constant 3.000000e+38 : f32
    %167 = vector.broadcast %cst_87 : f32 to vector<20x128xf32>
    %168 = arith.select %166, %148, %167 : vector<20x128xi1>, vector<20x128xf32>
    %cst_88 = arith.constant dense<0x7F800000> : vector<128xf32>
    %169 = vector.multi_reduction <minimumf>, %168, %cst_88 [0] : vector<20x128xf32> to vector<128xf32>
    %170 = vector.shape_cast %169 : vector<128xf32> to vector<1x128xf32>
    %c1 = arith.constant 1 : index
    %c0_89 = arith.constant 0 : index
    %171 = vector.load %arg7[%c1, %c0_89] : memref<20x128xf32, #tpu.memory_space<vmem>>, vector<1x128xf32>
    tpu.vector_store %arg7[%c1, %c0_89], %164 {strides = array<i32>} : memref<20x128xf32, #tpu.memory_space<vmem>>, vector<1x128xf32>,
    %c1_90 = arith.constant 1 : index
    %c0_91 = arith.constant 0 : index
    %172 = vector.load %arg8[%c1_90, %c0_91] : memref<20x128xf32, #tpu.memory_space<vmem>>, vector<1x128xf32>
    tpu.vector_store %arg8[%c1_90, %c0_91], %170 {strides = array<i32>} : memref<20x128xf32, #tpu.memory_space<vmem>>, vector<1x128xf32>,
    %173 = vector.broadcast %170 : vector<1x128xf32> to vector<20x128xf32>
    %174 = arith.cmpf oeq, %148, %173 : vector<20x128xf32>
    %cst_92 = arith.constant 0xFF800000 : f32
    %175 = vector.broadcast %cst_92 : f32 to vector<20x128xf32>
    %176 = arith.select %174, %175, %162 : vector<20x128xi1>, vector<20x128xf32>
    %cst_93 = arith.constant dense<0xFF800000> : vector<128xf32>
    %177 = vector.multi_reduction <maximumf>, %176, %cst_93 [0] : vector<20x128xf32> to vector<128xf32>
    %178 = vector.shape_cast %177 : vector<128xf32> to vector<1x128xf32>
    %179 = vector.broadcast %178 : vector<1x128xf32> to vector<20x128xf32>
    %180 = arith.cmpf oeq, %176, %179 : vector<20x128xf32>
    %cst_94 = arith.constant 3.000000e+38 : f32
    %181 = vector.broadcast %cst_94 : f32 to vector<20x128xf32>
    %182 = arith.select %180, %148, %181 : vector<20x128xi1>, vector<20x128xf32>
    %cst_95 = arith.constant dense<0x7F800000> : vector<128xf32>
    %183 = vector.multi_reduction <minimumf>, %182, %cst_95 [0] : vector<20x128xf32> to vector<128xf32>
    %184 = vector.shape_cast %183 : vector<128xf32> to vector<1x128xf32>
    %c2 = arith.constant 2 : index
    %c0_96 = arith.constant 0 : index
    %185 = vector.load %arg7[%c2, %c0_96] : memref<20x128xf32, #tpu.memory_space<vmem>>, vector<1x128xf32>
    tpu.vector_store %arg7[%c2, %c0_96], %178 {strides = array<i32>} : memref<20x128xf32, #tpu.memory_space<vmem>>, vector<1x128xf32>,
    %c2_97 = arith.constant 2 : index
    %c0_98 = arith.constant 0 : index
    %186 = vector.load %arg8[%c2_97, %c0_98] : memref<20x128xf32, #tpu.memory_space<vmem>>, vector<1x128xf32>
    tpu.vector_store %arg8[%c2_97, %c0_98], %184 {strides = array<i32>} : memref<20x128xf32, #tpu.memory_space<vmem>>, vector<1x128xf32>,
    %187 = vector.broadcast %184 : vector<1x128xf32> to vector<20x128xf32>
    %188 = arith.cmpf oeq, %148, %187 : vector<20x128xf32>
    %cst_99 = arith.constant 0xFF800000 : f32
    %189 = vector.broadcast %cst_99 : f32 to vector<20x128xf32>
    %190 = arith.select %188, %189, %176 : vector<20x128xi1>, vector<20x128xf32>
    %cst_100 = arith.constant dense<0xFF800000> : vector<128xf32>
    %191 = vector.multi_reduction <maximumf>, %190, %cst_100 [0] : vector<20x128xf32> to vector<128xf32>
    %192 = vector.shape_cast %191 : vector<128xf32> to vector<1x128xf32>
    %193 = vector.broadcast %192 : vector<1x128xf32> to vector<20x128xf32>
    %194 = arith.cmpf oeq, %190, %193 : vector<20x128xf32>
    %cst_101 = arith.constant 3.000000e+38 : f32
    %195 = vector.broadcast %cst_101 : f32 to vector<20x128xf32>
    %196 = arith.select %194, %148, %195 : vector<20x128xi1>, vector<20x128xf32>
    %cst_102 = arith.constant dense<0x7F800000> : vector<128xf32>
    %197 = vector.multi_reduction <minimumf>, %196, %cst_102 [0] : vector<20x128xf32> to vector<128xf32>
    %198 = vector.shape_cast %197 : vector<128xf32> to vector<1x128xf32>
    %c3 = arith.constant 3 : index
    %c0_103 = arith.constant 0 : index
    %199 = vector.load %arg7[%c3, %c0_103] : memref<20x128xf32, #tpu.memory_space<vmem>>, vector<1x128xf32>
    tpu.vector_store %arg7[%c3, %c0_103], %192 {strides = array<i32>} : memref<20x128xf32, #tpu.memory_space<vmem>>, vector<1x128xf32>,
    %c3_104 = arith.constant 3 : index
    %c0_105 = arith.constant 0 : index
    %200 = vector.load %arg8[%c3_104, %c0_105] : memref<20x128xf32, #tpu.memory_space<vmem>>, vector<1x128xf32>
    tpu.vector_store %arg8[%c3_104, %c0_105], %198 {strides = array<i32>} : memref<20x128xf32, #tpu.memory_space<vmem>>, vector<1x128xf32>,
    %201 = vector.broadcast %198 : vector<1x128xf32> to vector<20x128xf32>
    %202 = arith.cmpf oeq, %148, %201 : vector<20x128xf32>
    %cst_106 = arith.constant 0xFF800000 : f32
    %203 = vector.broadcast %cst_106 : f32 to vector<20x128xf32>
    %204 = arith.select %202, %203, %190 : vector<20x128xi1>, vector<20x128xf32>
    %cst_107 = arith.constant dense<0xFF800000> : vector<128xf32>
    %205 = vector.multi_reduction <maximumf>, %204, %cst_107 [0] : vector<20x128xf32> to vector<128xf32>
    %206 = vector.shape_cast %205 : vector<128xf32> to vector<1x128xf32>
    %207 = vector.broadcast %206 : vector<1x128xf32> to vector<20x128xf32>
    %208 = arith.cmpf oeq, %204, %207 : vector<20x128xf32>
    %cst_108 = arith.constant 3.000000e+38 : f32
    %209 = vector.broadcast %cst_108 : f32 to vector<20x128xf32>
    %210 = arith.select %208, %148, %209 : vector<20x128xi1>, vector<20x128xf32>
    %cst_109 = arith.constant dense<0x7F800000> : vector<128xf32>
    %211 = vector.multi_reduction <minimumf>, %210, %cst_109 [0] : vector<20x128xf32> to vector<128xf32>
    %212 = vector.shape_cast %211 : vector<128xf32> to vector<1x128xf32>
    %c4 = arith.constant 4 : index
    %c0_110 = arith.constant 0 : index
    %213 = vector.load %arg7[%c4, %c0_110] : memref<20x128xf32, #tpu.memory_space<vmem>>, vector<1x128xf32>
    tpu.vector_store %arg7[%c4, %c0_110], %206 {strides = array<i32>} : memref<20x128xf32, #tpu.memory_space<vmem>>, vector<1x128xf32>,
    %c4_111 = arith.constant 4 : index
    %c0_112 = arith.constant 0 : index
    %214 = vector.load %arg8[%c4_111, %c0_112] : memref<20x128xf32, #tpu.memory_space<vmem>>, vector<1x128xf32>
    tpu.vector_store %arg8[%c4_111, %c0_112], %212 {strides = array<i32>} : memref<20x128xf32, #tpu.memory_space<vmem>>, vector<1x128xf32>,
    %215 = vector.broadcast %212 : vector<1x128xf32> to vector<20x128xf32>
    %216 = arith.cmpf oeq, %148, %215 : vector<20x128xf32>
    %cst_113 = arith.constant 0xFF800000 : f32
    %217 = vector.broadcast %cst_113 : f32 to vector<20x128xf32>
    %218 = arith.select %216, %217, %204 : vector<20x128xi1>, vector<20x128xf32>
    %cst_114 = arith.constant dense<0xFF800000> : vector<128xf32>
    %219 = vector.multi_reduction <maximumf>, %218, %cst_114 [0] : vector<20x128xf32> to vector<128xf32>
    %220 = vector.shape_cast %219 : vector<128xf32> to vector<1x128xf32>
    %221 = vector.broadcast %220 : vector<1x128xf32> to vector<20x128xf32>
    %222 = arith.cmpf oeq, %218, %221 : vector<20x128xf32>
    %cst_115 = arith.constant 3.000000e+38 : f32
    %223 = vector.broadcast %cst_115 : f32 to vector<20x128xf32>
    %224 = arith.select %222, %148, %223 : vector<20x128xi1>, vector<20x128xf32>
    %cst_116 = arith.constant dense<0x7F800000> : vector<128xf32>
    %225 = vector.multi_reduction <minimumf>, %224, %cst_116 [0] : vector<20x128xf32> to vector<128xf32>
    %226 = vector.shape_cast %225 : vector<128xf32> to vector<1x128xf32>
    %c5 = arith.constant 5 : index
    %c0_117 = arith.constant 0 : index
    %227 = vector.load %arg7[%c5, %c0_117] : memref<20x128xf32, #tpu.memory_space<vmem>>, vector<1x128xf32>
    tpu.vector_store %arg7[%c5, %c0_117], %220 {strides = array<i32>} : memref<20x128xf32, #tpu.memory_space<vmem>>, vector<1x128xf32>,
    %c5_118 = arith.constant 5 : index
    %c0_119 = arith.constant 0 : index
    %228 = vector.load %arg8[%c5_118, %c0_119] : memref<20x128xf32, #tpu.memory_space<vmem>>, vector<1x128xf32>
    tpu.vector_store %arg8[%c5_118, %c0_119], %226 {strides = array<i32>} : memref<20x128xf32, #tpu.memory_space<vmem>>, vector<1x128xf32>,
    %229 = vector.broadcast %226 : vector<1x128xf32> to vector<20x128xf32>
    %230 = arith.cmpf oeq, %148, %229 : vector<20x128xf32>
    %cst_120 = arith.constant 0xFF800000 : f32
    %231 = vector.broadcast %cst_120 : f32 to vector<20x128xf32>
    %232 = arith.select %230, %231, %218 : vector<20x128xi1>, vector<20x128xf32>
    %cst_121 = arith.constant dense<0xFF800000> : vector<128xf32>
    %233 = vector.multi_reduction <maximumf>, %232, %cst_121 [0] : vector<20x128xf32> to vector<128xf32>
    %234 = vector.shape_cast %233 : vector<128xf32> to vector<1x128xf32>
    %235 = vector.broadcast %234 : vector<1x128xf32> to vector<20x128xf32>
    %236 = arith.cmpf oeq, %232, %235 : vector<20x128xf32>
    %cst_122 = arith.constant 3.000000e+38 : f32
    %237 = vector.broadcast %cst_122 : f32 to vector<20x128xf32>
    %238 = arith.select %236, %148, %237 : vector<20x128xi1>, vector<20x128xf32>
    %cst_123 = arith.constant dense<0x7F800000> : vector<128xf32>
    %239 = vector.multi_reduction <minimumf>, %238, %cst_123 [0] : vector<20x128xf32> to vector<128xf32>
    %240 = vector.shape_cast %239 : vector<128xf32> to vector<1x128xf32>
    %c6 = arith.constant 6 : index
    %c0_124 = arith.constant 0 : index
    %241 = vector.load %arg7[%c6, %c0_124] : memref<20x128xf32, #tpu.memory_space<vmem>>, vector<1x128xf32>
    tpu.vector_store %arg7[%c6, %c0_124], %234 {strides = array<i32>} : memref<20x128xf32, #tpu.memory_space<vmem>>, vector<1x128xf32>,
    %c6_125 = arith.constant 6 : index
    %c0_126 = arith.constant 0 : index
    %242 = vector.load %arg8[%c6_125, %c0_126] : memref<20x128xf32, #tpu.memory_space<vmem>>, vector<1x128xf32>
    tpu.vector_store %arg8[%c6_125, %c0_126], %240 {strides = array<i32>} : memref<20x128xf32, #tpu.memory_space<vmem>>, vector<1x128xf32>,
    %243 = vector.broadcast %240 : vector<1x128xf32> to vector<20x128xf32>
    %244 = arith.cmpf oeq, %148, %243 : vector<20x128xf32>
    %cst_127 = arith.constant 0xFF800000 : f32
    %245 = vector.broadcast %cst_127 : f32 to vector<20x128xf32>
    %246 = arith.select %244, %245, %232 : vector<20x128xi1>, vector<20x128xf32>
    %cst_128 = arith.constant dense<0xFF800000> : vector<128xf32>
    %247 = vector.multi_reduction <maximumf>, %246, %cst_128 [0] : vector<20x128xf32> to vector<128xf32>
    %248 = vector.shape_cast %247 : vector<128xf32> to vector<1x128xf32>
    %249 = vector.broadcast %248 : vector<1x128xf32> to vector<20x128xf32>
    %250 = arith.cmpf oeq, %246, %249 : vector<20x128xf32>
    %cst_129 = arith.constant 3.000000e+38 : f32
    %251 = vector.broadcast %cst_129 : f32 to vector<20x128xf32>
    %252 = arith.select %250, %148, %251 : vector<20x128xi1>, vector<20x128xf32>
    %cst_130 = arith.constant dense<0x7F800000> : vector<128xf32>
    %253 = vector.multi_reduction <minimumf>, %252, %cst_130 [0] : vector<20x128xf32> to vector<128xf32>
    %254 = vector.shape_cast %253 : vector<128xf32> to vector<1x128xf32>
    %c7 = arith.constant 7 : index
    %c0_131 = arith.constant 0 : index
    %255 = vector.load %arg7[%c7, %c0_131] : memref<20x128xf32, #tpu.memory_space<vmem>>, vector<1x128xf32>
    tpu.vector_store %arg7[%c7, %c0_131], %248 {strides = array<i32>} : memref<20x128xf32, #tpu.memory_space<vmem>>, vector<1x128xf32>,
    %c7_132 = arith.constant 7 : index
    %c0_133 = arith.constant 0 : index
    %256 = vector.load %arg8[%c7_132, %c0_133] : memref<20x128xf32, #tpu.memory_space<vmem>>, vector<1x128xf32>
    tpu.vector_store %arg8[%c7_132, %c0_133], %254 {strides = array<i32>} : memref<20x128xf32, #tpu.memory_space<vmem>>, vector<1x128xf32>,
    %257 = vector.broadcast %254 : vector<1x128xf32> to vector<20x128xf32>
    %258 = arith.cmpf oeq, %148, %257 : vector<20x128xf32>
    %cst_134 = arith.constant 0xFF800000 : f32
    %259 = vector.broadcast %cst_134 : f32 to vector<20x128xf32>
    %260 = arith.select %258, %259, %246 : vector<20x128xi1>, vector<20x128xf32>
    %cst_135 = arith.constant dense<0xFF800000> : vector<128xf32>
    %261 = vector.multi_reduction <maximumf>, %260, %cst_135 [0] : vector<20x128xf32> to vector<128xf32>
    %262 = vector.shape_cast %261 : vector<128xf32> to vector<1x128xf32>
    %263 = vector.broadcast %262 : vector<1x128xf32> to vector<20x128xf32>
    %264 = arith.cmpf oeq, %260, %263 : vector<20x128xf32>
    %cst_136 = arith.constant 3.000000e+38 : f32
    %265 = vector.broadcast %cst_136 : f32 to vector<20x128xf32>
    %266 = arith.select %264, %148, %265 : vector<20x128xi1>, vector<20x128xf32>
    %cst_137 = arith.constant dense<0x7F800000> : vector<128xf32>
    %267 = vector.multi_reduction <minimumf>, %266, %cst_137 [0] : vector<20x128xf32> to vector<128xf32>
    %268 = vector.shape_cast %267 : vector<128xf32> to vector<1x128xf32>
    %c8 = arith.constant 8 : index
    %c0_138 = arith.constant 0 : index
    %269 = vector.load %arg7[%c8, %c0_138] : memref<20x128xf32, #tpu.memory_space<vmem>>, vector<1x128xf32>
    tpu.vector_store %arg7[%c8, %c0_138], %262 {strides = array<i32>} : memref<20x128xf32, #tpu.memory_space<vmem>>, vector<1x128xf32>,
    %c8_139 = arith.constant 8 : index
    %c0_140 = arith.constant 0 : index
    %270 = vector.load %arg8[%c8_139, %c0_140] : memref<20x128xf32, #tpu.memory_space<vmem>>, vector<1x128xf32>
    tpu.vector_store %arg8[%c8_139, %c0_140], %268 {strides = array<i32>} : memref<20x128xf32, #tpu.memory_space<vmem>>, vector<1x128xf32>,
    %271 = vector.broadcast %268 : vector<1x128xf32> to vector<20x128xf32>
    %272 = arith.cmpf oeq, %148, %271 : vector<20x128xf32>
    %cst_141 = arith.constant 0xFF800000 : f32
    %273 = vector.broadcast %cst_141 : f32 to vector<20x128xf32>
    %274 = arith.select %272, %273, %260 : vector<20x128xi1>, vector<20x128xf32>
    %cst_142 = arith.constant dense<0xFF800000> : vector<128xf32>
    %275 = vector.multi_reduction <maximumf>, %274, %cst_142 [0] : vector<20x128xf32> to vector<128xf32>
    %276 = vector.shape_cast %275 : vector<128xf32> to vector<1x128xf32>
    %277 = vector.broadcast %276 : vector<1x128xf32> to vector<20x128xf32>
    %278 = arith.cmpf oeq, %274, %277 : vector<20x128xf32>
    %cst_143 = arith.constant 3.000000e+38 : f32
    %279 = vector.broadcast %cst_143 : f32 to vector<20x128xf32>
    %280 = arith.select %278, %148, %279 : vector<20x128xi1>, vector<20x128xf32>
    %cst_144 = arith.constant dense<0x7F800000> : vector<128xf32>
    %281 = vector.multi_reduction <minimumf>, %280, %cst_144 [0] : vector<20x128xf32> to vector<128xf32>
    %282 = vector.shape_cast %281 : vector<128xf32> to vector<1x128xf32>
    %c9 = arith.constant 9 : index
    %c0_145 = arith.constant 0 : index
    %283 = vector.load %arg7[%c9, %c0_145] : memref<20x128xf32, #tpu.memory_space<vmem>>, vector<1x128xf32>
    tpu.vector_store %arg7[%c9, %c0_145], %276 {strides = array<i32>} : memref<20x128xf32, #tpu.memory_space<vmem>>, vector<1x128xf32>,
    %c9_146 = arith.constant 9 : index
    %c0_147 = arith.constant 0 : index
    %284 = vector.load %arg8[%c9_146, %c0_147] : memref<20x128xf32, #tpu.memory_space<vmem>>, vector<1x128xf32>
    tpu.vector_store %arg8[%c9_146, %c0_147], %282 {strides = array<i32>} : memref<20x128xf32, #tpu.memory_space<vmem>>, vector<1x128xf32>,
    %c0_i32_148 = arith.constant 0 : i32
    %285 = arith.cmpi eq, %arg1, %c0_i32_148 : i32
    %286 = arith.extui %285 : i1 to i32
    %c0_i32_149 = arith.constant 0 : i32
    %287 = arith.cmpi ne, %286, %c0_i32_149 : i32
    scf.if %287 {
      %c0_150 = arith.constant 0 : index
      %c0_151 = arith.constant 0 : index
      %288 = vector.load %arg7[%c0_150, %c0_151] : memref<20x128xf32, #tpu.memory_space<vmem>>, vector<10x128xf32>
      %c0_152 = arith.constant 0 : index
      %c0_153 = arith.constant 0 : index
      %289 = vector.load %arg8[%c0_152, %c0_153] : memref<20x128xf32, #tpu.memory_space<vmem>>, vector<10x128xf32>
      %cst_154 = arith.constant dense<0xFF800000> : vector<128xf32>
      %290 = vector.multi_reduction <maximumf>, %288, %cst_154 [0] : vector<10x128xf32> to vector<128xf32>
      %291 = vector.shape_cast %290 : vector<128xf32> to vector<1x128xf32>
      %292 = vector.broadcast %291 : vector<1x128xf32> to vector<10x128xf32>
      %293 = arith.subf %288, %292 : vector<10x128xf32>
      %294 = math.exp %293 : vector<10x128xf32>
      %cst_155 = arith.constant dense<0.000000e+00> : vector<128xf32>
      %295 = vector.multi_reduction <add>, %294, %cst_155 [0] : vector<10x128xf32> to vector<128xf32>
      %296 = vector.shape_cast %295 : vector<128xf32> to vector<1x128xf32>
      %297 = vector.broadcast %296 : vector<1x128xf32> to vector<10x128xf32>
      %298 = arith.divf %294, %297 : vector<10x128xf32>
      %c0_156 = arith.constant 0 : index
      %c0_157 = arith.constant 0 : index
      %299 = vector.load %arg4[%c0_156, %c0_157] : memref<10x128xf32, #tpu.memory_space<vmem>>, vector<10x128xf32>
      tpu.vector_store %arg4[%c0_156, %c0_157], %298 {strides = array<i32>} : memref<10x128xf32, #tpu.memory_space<vmem>>, vector<10x128xf32>,
      %300 = arith.fptosi %289 : vector<10x128xf32> to vector<10x128xi32>
      %c0_158 = arith.constant 0 : index
      %c0_159 = arith.constant 0 : index
      %301 = vector.load %arg5[%c0_158, %c0_159] : memref<10x128xi32, #tpu.memory_space<vmem>>, vector<10x128xi32>
      tpu.vector_store %arg5[%c0_158, %c0_159], %300 {strides = array<i32>} : memref<10x128xi32, #tpu.memory_space<vmem>>, vector<10x128xi32>,
    } else {
    }
    return
  }
  func.func @transform_0(%arg0: i32, %arg1: i32) -> (i32, i32) {
    %c0_i32 = arith.constant 0 : i32
    %c0_i32_0 = arith.constant 0 : i32
    return %arg0, %c0_i32 : i32, i32
  }
  func.func @transform_1(%arg0: i32, %arg1: i32) -> (i32, i32) {
    %c0_i32 = arith.constant 0 : i32
    %c0_i32_0 = arith.constant 0 : i32
    return %arg1, %c0_i32 : i32, i32
  }
  func.func @transform_2(%arg0: i32, %arg1: i32) -> (i32, i32) {
    %c0_i32 = arith.constant 0 : i32
    %c0_i32_0 = arith.constant 0 : i32
    return %c0_i32, %arg0 : i32, i32
  }
  func.func @transform_3(%arg0: i32, %arg1: i32) -> (i32, i32) {
    %c0_i32 = arith.constant 0 : i32
    %c0_i32_0 = arith.constant 0 : i32
    return %c0_i32, %arg0 : i32, i32
  }
}

</mosaic_0001>

<llo_original>
// kernel: tpu_custom_call.1
$region0: #{tpu_custom_call.1}
  #allocation0 [shape = 'u32[]', space=smem, size = 0x4, offset = 0x4, fixed_abs, tag = 'smem constant byte address 0x4 - core index']
  #allocation1 [shape = 'u32[144,128]{1,0:T(1,128)}', space=vmem, size = 0x12000, scoped, tag = 'internal scratch']
  #allocation2 [shape = 'bf16[128,32]{1,0:T(16,128)(2,1)}', space=vmem, size = 0x8000, scoped, tag = 'scratch operand']
  #allocation3 [shape = 'f32[20,128]{1,0:T(8,128)}', space=vmem, size = 0x3000, scoped, tag = 'scratch operand']
  #allocation4 [shape = 'f32[20,128]{1,0:T(8,128)}', space=vmem, size = 0x3000, scoped, tag = 'scratch operand']
  %s0 = inlined_call_operand.vmem [shape: f32[128,32], index: 0, kind: input, shape index: {}]
  %s1 = inlined_call_operand.vmem [shape: bf16[128,32], index: 1, kind: input, shape index: {}]
  %s2 = inlined_call_operand.hbm [shape: f32[10,128], index: 2, kind: output, shape index: {0}]
  %s3 = inlined_call_operand.hbm [shape: s32[10,128], index: 3, kind: output, shape index: {1}]
  %4 = xla_tuple %s2, %s3
  %s5 = sld [smem:[#allocation0]]
  $region34: #{tpu_custom_call.1} parent=0
    _
  %s7 = ssub.s32 1, %s5
  %s8 = scalar_select 0, %s7, %s5
  $region1: #{tpu_custom_call.1} parent=0
    #allocation5 [shape = 'u8[8192]{0}', space=vmem, size = 0x2000, scoped, tag = 'output window, operand 0, single buffered']
    #allocation6 [shape = 's32[1]{0}', space=sflag, size = 0x4, scoped, tag = 'scoped memory for tpu_custom_call.1']
    #allocation7 [shape = 'u8[8192]{0}', space=vmem, size = 0x2000, scoped, tag = 'output window, operand 1, single buffered']
    #allocation8 [shape = 's32[1]{0}', space=sflag, size = 0x4, scoped, tag = 'scoped memory for tpu_custom_call.1']
    %9 = vsyncpa [#allocation6], 0
    %10 = vsyncpa [#allocation8], 0
    // Predicated region
    $region2: #{tpu_custom_call.1} parent=1 // pred_check
      _
    $region3: #{tpu_custom_call.1} parent=1 // pred_check_branch
      %12 = sbr.rel (0) target = $region5
    $region4: #{tpu_custom_call.1} parent=1 // pred_region
      _
    $region5: #{tpu_custom_call.1} parent=1 // pred_fallthru
      _
    // Predicated region
    $region6: #{tpu_custom_call.1} parent=1 // pred_check
      _
    $region7: #{tpu_custom_call.1} parent=1 // pred_check_branch
      %14 = sbr.rel (0) target = $region9
    $region8: #{tpu_custom_call.1} parent=1 // pred_region
      _
    $region9: #{tpu_custom_call.1} parent=1 // pred_fallthru
      _
    %p16 = scmp.eq.s32.totalorder 0, 0
    // Predicated region
    $region10: #{tpu_custom_call.1} parent=1 // pred_check
      %p17 = pneg %p16
    $region11: #{tpu_custom_call.1} parent=1 // pred_check_branch
      %19 = sbr.rel (%p17) target = $region13
    $region12: #{tpu_custom_call.1} parent=1 // pred_region
      %v20 = vld [vmem:[%s0] sm:$0xff]
      %v21 = vld [vmem:[%s0 + $0x8] sm:$0xff]
      %v22 = vld [vmem:[%s0 + $0x10] sm:$0xff]
      %v23 = vld [vmem:[%s0 + $0x18] sm:$0xff]
      %v24 = vld [vmem:[%s0 + $0x20] sm:$0xff]
      %v25 = vld [vmem:[%s0 + $0x28] sm:$0xff]
      %v26 = vld [vmem:[%s0 + $0x30] sm:$0xff]
      %v27 = vld [vmem:[%s0 + $0x38] sm:$0xff]
      %v28 = vld [vmem:[%s0 + $0x40] sm:$0xff]
      %v29 = vld [vmem:[%s0 + $0x48] sm:$0xff]
      %v30 = vld [vmem:[%s0 + $0x50] sm:$0xff]
      %v31 = vld [vmem:[%s0 + $0x58] sm:$0xff]
      %v32 = vld [vmem:[%s0 + $0x60] sm:$0xff]
      %v33 = vld [vmem:[%s0 + $0x68] sm:$0xff]
      %v34 = vld [vmem:[%s0 + $0x70] sm:$0xff]
      %v35 = vld [vmem:[%s0 + $0x78] sm:$0xff]
      %v36 = vmul.f32 %v20, %v20
      %v37 = vmul.f32 %v21, %v21
      %v38 = vmul.f32 %v22, %v22
      %v39 = vmul.f32 %v23, %v23
      %v40 = vmul.f32 %v24, %v24
      %v41 = vmul.f32 %v25, %v25
      %v42 = vmul.f32 %v26, %v26
      %v43 = vmul.f32 %v27, %v27
      %v44 = vmul.f32 %v28, %v28
      %v45 = vmul.f32 %v29, %v29
      %v46 = vmul.f32 %v30, %v30
      %v47 = vmul.f32 %v31, %v31
      %v48 = vmul.f32 %v32, %v32
      %v49 = vmul.f32 %v33, %v33
      %v50 = vmul.f32 %v34, %v34
      %v51 = vmul.f32 %v35, %v35
      %vm52 = vcmask 261120
      %v53 = vsel %vm52, %v36, 0.0
      %54 = vadd.xlane.f32.xlu0 %v53
      %v55 = vpop.xlane.xlu0 %54
      %v56 = vsel %vm52, %v37, 0.0
      %57 = vadd.xlane.f32.xlu0 %v56
      %v58 = vpop.xlane.xlu0 %57
      %v59 = vsel %vm52, %v38, 0.0
      %60 = vadd.xlane.f32.xlu0 %v59
      %v61 = vpop.xlane.xlu0 %60
      %v62 = vsel %vm52, %v39, 0.0
      %63 = vadd.xlane.f32.xlu0 %v62
      %v64 = vpop.xlane.xlu0 %63
      %v65 = vsel %vm52, %v40, 0.0
      %66 = vadd.xlane.f32.xlu0 %v65
      %v67 = vpop.xlane.xlu0 %66
      %v68 = vsel %vm52, %v41, 0.0
      %69 = vadd.xlane.f32.xlu0 %v68
      %v70 = vpop.xlane.xlu0 %69
      %v71 = vsel %vm52, %v42, 0.0
      %72 = vadd.xlane.f32.xlu0 %v71
      %v73 = vpop.xlane.xlu0 %72
      %v74 = vsel %vm52, %v43, 0.0
      %75 = vadd.xlane.f32.xlu0 %v74
      %v76 = vpop.xlane.xlu0 %75
      %v77 = vsel %vm52, %v44, 0.0
      %78 = vadd.xlane.f32.xlu0 %v77
      %v79 = vpop.xlane.xlu0 %78
      %v80 = vsel %vm52, %v45, 0.0
      %81 = vadd.xlane.f32.xlu0 %v80
      %v82 = vpop.xlane.xlu0 %81
      %v83 = vsel %vm52, %v46, 0.0
      %84 = vadd.xlane.f32.xlu0 %v83
      %v85 = vpop.xlane.xlu0 %84
      %v86 = vsel %vm52, %v47, 0.0
      %87 = vadd.xlane.f32.xlu0 %v86
      %v88 = vpop.xlane.xlu0 %87
      %v89 = vsel %vm52, %v48, 0.0
      %90 = vadd.xlane.f32.xlu0 %v89
      %v91 = vpop.xlane.xlu0 %90
      %v92 = vsel %vm52, %v49, 0.0
      %93 = vadd.xlane.f32.xlu0 %v92
      %v94 = vpop.xlane.xlu0 %93
      %v95 = vsel %vm52, %v50, 0.0
      %96 = vadd.xlane.f32.xlu0 %v95
      %v97 = vpop.xlane.xlu0 %96
      %v98 = vsel %vm52, %v51, 0.0
      %99 = vadd.xlane.f32.xlu0 %v98
      %v100 = vpop.xlane.xlu0 %99
      %v101 = vmax.f32 %v55, 1e-24
      %v102 = vmax.f32 %v58, 1e-24
      %v103 = vmax.f32 %v61, 1e-24
      %v104 = vmax.f32 %v64, 1e-24
      %v105 = vmax.f32 %v67, 1e-24
      %v106 = vmax.f32 %v70, 1e-24
      %v107 = vmax.f32 %v73, 1e-24
      %v108 = vmax.f32 %v76, 1e-24
      %v109 = vmax.f32 %v79, 1e-24
      %v110 = vmax.f32 %v82, 1e-24
      %v111 = vmax.f32 %v85, 1e-24
      %v112 = vmax.f32 %v88, 1e-24
      %v113 = vmax.f32 %v91, 1e-24
      %v114 = vmax.f32 %v94, 1e-24
      %v115 = vmax.f32 %v97, 1e-24
      %v116 = vmax.f32 %v100, 1e-24
      %v117 = vrsqrt.pop %v101
      %v118 = vrsqrt.pop %v102
      %v119 = vrsqrt.pop %v103
      %v120 = vrsqrt.pop %v104
      %v121 = vrsqrt.pop %v105
      %v122 = vrsqrt.pop %v106
      %v123 = vrsqrt.pop %v107
      %v124 = vrsqrt.pop %v108
      %v125 = vrsqrt.pop %v109
      %v126 = vrsqrt.pop %v110
      %v127 = vrsqrt.pop %v111
      %v128 = vrsqrt.pop %v112
      %v129 = vrsqrt.pop %v113
      %v130 = vrsqrt.pop %v114
      %v131 = vrsqrt.pop %v115
      %v132 = vrsqrt.pop %v116
      %v133 = vmul.f32 %v117, 20.0
      %v134 = vmul.f32 %v118, 20.0
      %v135 = vmul.f32 %v119, 20.0
      %v136 = vmul.f32 %v120, 20.0
      %v137 = vmul.f32 %v121, 20.0
      %v138 = vmul.f32 %v122, 20.0
      %v139 = vmul.f32 %v123, 20.0
      %v140 = vmul.f32 %v124, 20.0
      %v141 = vmul.f32 %v125, 20.0
      %v142 = vmul.f32 %v126, 20.0
      %v143 = vmul.f32 %v127, 20.0
      %v144 = vmul.f32 %v128, 20.0
      %v145 = vmul.f32 %v129, 20.0
      %v146 = vmul.f32 %v130, 20.0
      %v147 = vmul.f32 %v131, 20.0
      %v148 = vmul.f32 %v132, 20.0
      %v149 = vmul.f32 %v20, %v133
      %v150 = vmul.f32 %v21, %v134
      %v151 = vmul.f32 %v22, %v135
      %v152 = vmul.f32 %v23, %v136
      %v153 = vmul.f32 %v24, %v137
      %v154 = vmul.f32 %v25, %v138
      %v155 = vmul.f32 %v26, %v139
      %v156 = vmul.f32 %v27, %v140
      %v157 = vmul.f32 %v28, %v141
      %v158 = vmul.f32 %v29, %v142
      %v159 = vmul.f32 %v30, %v143
      %v160 = vmul.f32 %v31, %v144
      %v161 = vmul.f32 %v32, %v145
      %v162 = vmul.f32 %v33, %v146
      %v163 = vmul.f32 %v34, %v147
      %v164 = vmul.f32 %v35, %v148
      %v165 = vpack.c.bf16 %v150, %v149
      %v166 = vpack.c.bf16 %v152, %v151
      %v167 = vpack.c.bf16 %v154, %v153
      %v168 = vpack.c.bf16 %v156, %v155
      %v169 = vpack.c.bf16 %v158, %v157
      %v170 = vpack.c.bf16 %v160, %v159
      %v171 = vpack.c.bf16 %v162, %v161
      %v172 = vpack.c.bf16 %v164, %v163
      %173 = vst.msk [vmem:[#allocation2] sm:$0xff] %vm52, %v165
      %174 = vst.msk [vmem:[#allocation2 + $0x8] sm:$0xff] %vm52, %v166
      %175 = vst.msk [vmem:[#allocation2 + $0x10] sm:$0xff] %vm52, %v167
      %176 = vst.msk [vmem:[#allocation2 + $0x18] sm:$0xff] %vm52, %v168
      %177 = vst.msk [vmem:[#allocation2 + $0x20] sm:$0xff] %vm52, %v169
      %178 = vst.msk [vmem:[#allocation2 + $0x28] sm:$0xff] %vm52, %v170
      %179 = vst.msk [vmem:[#allocation2 + $0x30] sm:$0xff] %vm52, %v171
      %180 = vst.msk [vmem:[#allocation2 + $0x38] sm:$0xff] %vm52, %v172
      %181 = vst [vmem:[#allocation3] sm:$0xff] -inf
      %182 = vst [vmem:[#allocation3 + $0x8] sm:$0x3] -inf
      %v183 = vlaneseq
      %v184 = vshrl.u32 %v183, 7
      %v185 = vadd.s32 %v184, 8
      %v186 = vcvt.s32.f32 %v184
      %v187 = vcvt.s32.f32 %v185
      %v188 = vadd.f32 %v186, 1.0
      %v189 = vadd.f32 %v187, 1.0
      %v190 = vsub.f32 0.0, %v188
      %v191 = vsub.f32 0.0, %v189
      %192 = vst [vmem:[#allocation4] sm:$0xff] %v190
      %193 = vst [vmem:[#allocation4 + $0x8] sm:$0x3] %v191
    $region13: #{tpu_custom_call.1} parent=1 // pred_fallthru
      _
    %v194 = vld [vmem:[%s1] sm:$0xf]
    %v195 = vld [vmem:[%s1 + $0x4] sm:$0xf]
    %v196 = vld [vmem:[%s1 + $0x8] sm:$0xf]
    %v197 = vld [vmem:[%s1 + $0xc] sm:$0xf]
    %v198 = vld [vmem:[%s1 + $0x10] sm:$0xf]
    %v199 = vld [vmem:[%s1 + $0x14] sm:$0xf]
    %v200 = vld [vmem:[%s1 + $0x18] sm:$0xf]
    %v201 = vld [vmem:[%s1 + $0x1c] sm:$0xf]
    %v202 = vld [vmem:[%s1 + $0x20] sm:$0xf]
    %v203 = vld [vmem:[%s1 + $0x24] sm:$0xf]
    %v204 = vld [vmem:[%s1 + $0x28] sm:$0xf]
    %v205 = vld [vmem:[%s1 + $0x2c] sm:$0xf]
    %v206 = vld [vmem:[%s1 + $0x30] sm:$0xf]
    %v207 = vld [vmem:[%s1 + $0x34] sm:$0xf]
    %v208 = vld [vmem:[%s1 + $0x38] sm:$0xf]
    %v209 = vld [vmem:[%s1 + $0x3c] sm:$0xf]
    %v210 = vld [vmem:[#allocation2] sm:$0xff]
    %v211 = vld [vmem:[#allocation2 + $0x8] sm:$0xff]
    %v212 = vld [vmem:[#allocation2 + $0x10] sm:$0xff]
    %v213 = vld [vmem:[#allocation2 + $0x18] sm:$0xff]
    %v214 = vld [vmem:[#allocation2 + $0x20] sm:$0xff]
    %v215 = vld [vmem:[#allocation2 + $0x28] sm:$0xff]
    %v216 = vld [vmem:[#allocation2 + $0x30] sm:$0xff]
    %v217 = vld [vmem:[#allocation2 + $0x38] sm:$0xff]
    %v234 = vunpack.c.l.b16 %v194
    %v235 = vunpack.c.l.b16 %v195
    %v236 = vunpack.c.l.b16 %v196
    %v237 = vunpack.c.l.b16 %v197
    %v238 = vunpack.c.l.b16 %v198
    %v239 = vunpack.c.l.b16 %v199
    %v240 = vunpack.c.l.b16 %v200
    %v241 = vunpack.c.l.b16 %v201
    %v242 = vunpack.c.l.b16 %v202
    %v243 = vunpack.c.l.b16 %v203
    %v244 = vunpack.c.l.b16 %v204
    %v245 = vunpack.c.l.b16 %v205
    %v246 = vunpack.c.l.b16 %v206
    %v247 = vunpack.c.l.b16 %v207
    %v248 = vunpack.c.l.b16 %v208
    %v249 = vunpack.c.l.b16 %v209
    %v250 = vpack.c.b16 %v235, %v234
    %v251 = vpack.c.b16 %v237, %v236
    %v252 = vpack.c.b16 %v239, %v238
    %v253 = vpack.c.b16 %v241, %v240
    %v254 = vpack.c.b16 %v243, %v242
    %v255 = vpack.c.b16 %v245, %v244
    %v256 = vpack.c.b16 %v247, %v246
    %v257 = vpack.c.b16 %v249, %v248
    %vm258 = vcmask 261120
    %v260 = vsel %vm258, %v250, 0
    %v263 = vsel %vm258, %v251, 0
    %v266 = vsel %vm258, %v252, 0
    %v269 = vsel %vm258, %v253, 0
    %v272 = vsel %vm258, %v254, 0
    %v275 = vsel %vm258, %v255, 0
    %v278 = vsel %vm258, %v256, 0
    %v281 = vsel %vm258, %v257, 0
    %v284 = vsel %vm258, %v210, 0
    %v287 = vsel %vm258, %v211, 0
    %v290 = vsel %vm258, %v212, 0
    %v293 = vsel %vm258, %v213, 0
    %v296 = vsel %vm258, %v214, 0
    %v299 = vsel %vm258, %v215, 0
    %v302 = vsel %vm258, %v216, 0
    %v305 = vsel %vm258, %v217, 0
    %307 = vmatprep.subr.bf16.mxu0 0
    %308 = vmatpush1.bf16.xpose.msra.mxu0 %v284
    %309 = vmatprep.subr.bf16.mxu0 0
    %310 = vmatpush1.bf16.xpose.msra.mxu0 %v287
    %311 = vmatprep.subr.bf16.mxu0 0
    %312 = vmatpush1.bf16.xpose.msra.mxu0 %v290
    %313 = vmatprep.subr.bf16.mxu0 0
    %314 = vmatpush1.bf16.xpose.msra.mxu0 %v293
    %315 = vmatprep.subr.bf16.mxu0 0
    %316 = vmatpush1.bf16.xpose.msra.mxu0 %v296
    %317 = vmatprep.subr.bf16.mxu0 0
    %318 = vmatpush1.bf16.xpose.msra.mxu0 %v299
    %319 = vmatprep.subr.bf16.mxu0 0
    %320 = vmatpush1.bf16.xpose.msra.mxu0 %v302
    %321 = vmatprep.subr.bf16.mxu0 0
    %322 = vmatpush1.bf16.xpose.msra.mxu0 %v305
    %323 = vmatprep.subr.bf16.mxu0 0
    %324 = vmatpush1.bf16.xpose.msra.mxu0 0
    %325 = vmatprep.subr.bf16.mxu0 0
    %326 = vmatpush1.bf16.xpose.msra.mxu0 0
    %327 = vmatprep.subr.bf16.mxu0 0
    %328 = vmatpush1.bf16.xpose.msra.mxu0 0
    %329 = vmatprep.subr.bf16.mxu0 0
    %330 = vmatpush1.bf16.xpose.msra.mxu0 0
    %331 = vmatprep.subr.bf16.mxu0 0
    %332 = vmatpush1.bf16.xpose.msra.mxu0 0
    %333 = vmatprep.subr.bf16.mxu0 0
    %334 = vmatpush1.bf16.xpose.msra.mxu0 0
    %335 = vmatprep.subr.bf16.mxu0 0
    %336 = vmatpush1.bf16.xpose.msra.mxu0 0
    %337 = vmatprep.subr.bf16.mxu0 0
    %338 = vmatpush1.bf16.xpose.msra.mxu0 0
    %339 = vmatprep.mubr.bf16.mxu0 0
    %340 = vmatmul.mubr.bf16.gmra.mrb[0].mxu0 %v260
    %v341 = vpop.f32.mrb[0].mxu0
    %v342 = vadd.f32 0.0, %v341
    %v343 = vpop.f32.mrb[0].mxu0
    %v344 = vpop.f32.mrb[0].mxu0
    %v345 = vadd.f32 0.0, %v344
    %v346 = vpop.f32.mrb[0].mxu0
    %347 = vmatprep.mubr.bf16.mxu0 0
    %348 = vmatmul.mubr.bf16.gmra.mrb[0].mxu0 %v263
    %v349 = vpop.f32.mrb[0].mxu0
    %v350 = vadd.f32 0.0, %v349
    %v351 = vpop.f32.mrb[0].mxu0
    %v352 = vpop.f32.mrb[0].mxu0
    %v353 = vadd.f32 0.0, %v352
    %v354 = vpop.f32.mrb[0].mxu0
    %355 = vmatprep.mubr.bf16.mxu0 0
    %356 = vmatmul.mubr.bf16.gmra.mrb[0].mxu0 %v266
    %v357 = vpop.f32.mrb[0].mxu0
    %v358 = vadd.f32 0.0, %v357
    %v359 = vpop.f32.mrb[0].mxu0
    %v360 = vpop.f32.mrb[0].mxu0
    %v361 = vadd.f32 0.0, %v360
    %v362 = vpop.f32.mrb[0].mxu0
    %363 = vmatprep.mubr.bf16.mxu0 0
    %364 = vmatmul.mubr.bf16.gmra.mrb[0].mxu0 %v269
    %v365 = vpop.f32.mrb[0].mxu0
    %v366 = vadd.f32 0.0, %v365
    %v367 = vpop.f32.mrb[0].mxu0
    %v368 = vpop.f32.mrb[0].mxu0
    %v369 = vadd.f32 0.0, %v368
    %v370 = vpop.f32.mrb[0].mxu0
    %371 = vmatprep.mubr.bf16.mxu0 0
    %372 = vmatmul.mubr.bf16.gmra.mrb[0].mxu0 %v272
    %v373 = vpop.f32.mrb[0].mxu0
    %v374 = vadd.f32 0.0, %v373
    %v375 = vpop.f32.mrb[0].mxu0
    %v376 = vpop.f32.mrb[0].mxu0
    %v377 = vadd.f32 0.0, %v376
    %v378 = vpop.f32.mrb[0].mxu0
    %379 = vmatprep.mubr.bf16.mxu0 0
    %380 = vmatmul.mubr.bf16.gmra.mrb[0].mxu0 %v275
    %v381 = vpop.f32.mrb[0].mxu0
    %v382 = vadd.f32 0.0, %v381
    %v383 = vpop.f32.mrb[0].mxu0
    %v384 = vpop.f32.mrb[0].mxu0
    %v385 = vadd.f32 0.0, %v384
    %v386 = vpop.f32.mrb[0].mxu0
    %387 = vmatprep.mubr.bf16.mxu0 0
    %388 = vmatmul.mubr.bf16.gmra.mrb[0].mxu0 %v278
    %v389 = vpop.f32.mrb[0].mxu0
    %v390 = vadd.f32 0.0, %v389
    %v391 = vpop.f32.mrb[0].mxu0
    %v392 = vpop.f32.mrb[0].mxu0
    %v393 = vadd.f32 0.0, %v392
    %v394 = vpop.f32.mrb[0].mxu0
    %395 = vmatprep.mubr.bf16.mxu0 0
    %396 = vmatmul.mubr.bf16.gmra.mrb[0].mxu0 %v281
    %v397 = vpop.f32.mrb[0].mxu0
    %v398 = vadd.f32 0.0, %v397
    %v399 = vpop.f32.mrb[0].mxu0
    %v400 = vpop.f32.mrb[0].mxu0
    %v401 = vadd.f32 0.0, %v400
    %v402 = vpop.f32.mrb[0].mxu0
    %403 = vdwg.mxu0
    %s404 = smul.u32 0, 128
    %v405 = vlaneseq
    %v406 = vshrl.u32 %v405, 7
    %v407 = vadd.s32 %v406, 8
    %v408 = vadd.s32 %v406, 16
    %v409 = vadd.s32 %v406, 24
    %v410 = vadd.s32 %v406, 32
    %v411 = vadd.s32 %v406, 40
    %v412 = vadd.s32 %v406, 48
    %v413 = vadd.s32 %v406, 56
    %v414 = vadd.s32 %v406, 64
    %v415 = vadd.s32 %v406, 72
    %v416 = vadd.s32 %v406, 80
    %v417 = vadd.s32 %v406, 88
    %v418 = vadd.s32 %v406, 96
    %v419 = vadd.s32 %v406, 104
    %v420 = vadd.s32 %v406, 112
    %v421 = vadd.s32 %v406, 120
    %v422 = vstv %s404
    %v423 = vadd.s32 %v422, %v406
    %v424 = vadd.s32 %v422, %v407
    %v425 = vadd.s32 %v422, %v408
    %v426 = vadd.s32 %v422, %v409
    %v427 = vadd.s32 %v422, %v410
    %v428 = vadd.s32 %v422, %v411
    %v429 = vadd.s32 %v422, %v412
    %v430 = vadd.s32 %v422, %v413
    %v431 = vadd.s32 %v422, %v414
    %v432 = vadd.s32 %v422, %v415
    %v433 = vadd.s32 %v422, %v416
    %v434 = vadd.s32 %v422, %v417
    %v435 = vadd.s32 %v422, %v418
    %v436 = vadd.s32 %v422, %v419
    %v437 = vadd.s32 %v422, %v420
    %v438 = vadd.s32 %v422, %v421
    %v439 = vcvt.s32.f32 %v423
    %v440 = vcvt.s32.f32 %v424
    %v441 = vcvt.s32.f32 %v425
    %v442 = vcvt.s32.f32 %v426
    %v443 = vcvt.s32.f32 %v427
    %v444 = vcvt.s32.f32 %v428
    %v445 = vcvt.s32.f32 %v429
    %v446 = vcvt.s32.f32 %v430
    %v447 = vcvt.s32.f32 %v431
    %v448 = vcvt.s32.f32 %v432
    %v449 = vcvt.s32.f32 %v433
    %v450 = vcvt.s32.f32 %v434
    %v451 = vcvt.s32.f32 %v435
    %v452 = vcvt.s32.f32 %v436
    %v453 = vcvt.s32.f32 %v437
    %v454 = vcvt.s32.f32 %v438
    %v455 = vmax.f32 %v342, %v358
    %v456 = vmax.f32 %v345, %v361
    %v457 = vmax.f32 %v350, %v366
    %v458 = vmax.f32 %v353, %v369
    %v459 = vmax.f32 %v455, %v374
    %v460 = vmax.f32 %v456, %v377
    %v461 = vmax.f32 %v457, %v382
    %v462 = vmax.f32 %v458, %v385
    %v463 = vmax.f32 %v459, %v390
    %v464 = vmax.f32 %v460, %v393
    %v465 = vmax.f32 %v461, %v398
    %v466 = vmax.f32 %v462, %v401
    %v467 = vmax.f32 %v463, %v464
    %v468 = vmax.f32 %v465, %v466
    %v469 = vmax.f32 %v467, %v468
    %v470 = vrot.slane %v469, 4
    %v471 = vmax.f32 %v469, %v470
    %v472 = vrot.slane %v471, 2
    %v473 = vmax.f32 %v471, %v472
    %v474 = vrot.slane %v473, 1
    %v475 = vmax.f32 %v473, %v474
    %vm476 = vcmp.eq.f32.partialorder %v342, %v475
    %vm477 = vcmp.eq.f32.partialorder %v345, %v475
    %vm478 = vcmp.eq.f32.partialorder %v350, %v475
    %vm479 = vcmp.eq.f32.partialorder %v353, %v475
    %vm480 = vcmp.eq.f32.partialorder %v358, %v475
    %vm481 = vcmp.eq.f32.partialorder %v361, %v475
    %vm482 = vcmp.eq.f32.partialorder %v366, %v475
    %vm483 = vcmp.eq.f32.partialorder %v369, %v475
    %vm484 = vcmp.eq.f32.partialorder %v374, %v475
    %vm485 = vcmp.eq.f32.partialorder %v377, %v475
    %vm486 = vcmp.eq.f32.partialorder %v382, %v475
    %vm487 = vcmp.eq.f32.partialorder %v385, %v475
    %vm488 = vcmp.eq.f32.partialorder %v390, %v475
    %vm489 = vcmp.eq.f32.partialorder %v393, %v475
    %vm490 = vcmp.eq.f32.partialorder %v398, %v475
    %vm491 = vcmp.eq.f32.partialorder %v401, %v475
    %v492 = vsel %vm476, %v439, 3e+38
    %v493 = vsel %vm477, %v440, 3e+38
    %v494 = vsel %vm478, %v441, 3e+38
    %v495 = vsel %vm479, %v442, 3e+38
    %v496 = vsel %vm480, %v443, 3e+38
    %v497 = vsel %vm481, %v444, 3e+38
    %v498 = vsel %vm482, %v445, 3e+38
    %v499 = vsel %vm483, %v446, 3e+38
    %v500 = vsel %vm484, %v447, 3e+38
    %v501 = vsel %vm485, %v448, 3e+38
    %v502 = vsel %vm486, %v449, 3e+38
    %v503 = vsel %vm487, %v450, 3e+38
    %v504 = vsel %vm488, %v451, 3e+38
    %v505 = vsel %vm489, %v452, 3e+38
    %v506 = vsel %vm490, %v453, 3e+38
    %v507 = vsel %vm491, %v454, 3e+38
    %v508 = vmin.f32 %v492, %v496
    %v509 = vmin.f32 %v493, %v497
    %v510 = vmin.f32 %v494, %v498
    %v511 = vmin.f32 %v495, %v499
    %v512 = vmin.f32 %v508, %v500
    %v513 = vmin.f32 %v509, %v501
    %v514 = vmin.f32 %v510, %v502
    %v515 = vmin.f32 %v511, %v503
    %v516 = vmin.f32 %v512, %v504
    %v517 = vmin.f32 %v513, %v505
    %v518 = vmin.f32 %v514, %v506
    %v519 = vmin.f32 %v515, %v507
    %v520 = vmin.f32 %v516, %v517
    %v521 = vmin.f32 %v518, %v519
    %v522 = vmin.f32 %v520, %v521
    %v523 = vrot.slane %v522, 4
    %v524 = vmin.f32 %v522, %v523
    %v525 = vrot.slane %v524, 2
    %v526 = vmin.f32 %v524, %v525
    %v527 = vrot.slane %v526, 1
    %v528 = vmin.f32 %v526, %v527
    %529 = vst [vmem:[#allocation3 + $0xa] sm:$0x1] %v475
    %530 = vst [vmem:[#allocation4 + $0xa] sm:$0x1] %v528
    %vm531 = vcmp.eq.f32.partialorder %v439, %v528
    %vm532 = vcmp.eq.f32.partialorder %v440, %v528
    %vm533 = vcmp.eq.f32.partialorder %v441, %v528
    %vm534 = vcmp.eq.f32.partialorder %v442, %v528
    %vm535 = vcmp.eq.f32.partialorder %v443, %v528
    %vm536 = vcmp.eq.f32.partialorder %v444, %v528
    %vm537 = vcmp.eq.f32.partialorder %v445, %v528
    %vm538 = vcmp.eq.f32.partialorder %v446, %v528
    %vm539 = vcmp.eq.f32.partialorder %v447, %v528
    %vm540 = vcmp.eq.f32.partialorder %v448, %v528
    %vm541 = vcmp.eq.f32.partialorder %v449, %v528
    %vm542 = vcmp.eq.f32.partialorder %v450, %v528
    %vm543 = vcmp.eq.f32.partialorder %v451, %v528
    %vm544 = vcmp.eq.f32.partialorder %v452, %v528
    %vm545 = vcmp.eq.f32.partialorder %v453, %v528
    %vm546 = vcmp.eq.f32.partialorder %v454, %v528
    %v547 = vsel %vm531, -inf, %v342
    %v548 = vsel %vm532, -inf, %v345
    %v549 = vsel %vm533, -inf, %v350
    %v550 = vsel %vm534, -inf, %v353
    %v551 = vsel %vm535, -inf, %v358
    %v552 = vsel %vm536, -inf, %v361
    %v553 = vsel %vm537, -inf, %v366
    %v554 = vsel %vm538, -inf, %v369
    %v555 = vsel %vm539, -inf, %v374
    %v556 = vsel %vm540, -inf, %v377
    %v557 = vsel %vm541, -inf, %v382
    %v558 = vsel %vm542, -inf, %v385
    %v559 = vsel %vm543, -inf, %v390
    %v560 = vsel %vm544, -inf, %v393
    %v561 = vsel %vm545, -inf, %v398
    %v562 = vsel %vm546, -inf, %v401
    %v563 = vmax.f32 %v547, %v551
    %v564 = vmax.f32 %v548, %v552
    %v565 = vmax.f32 %v549, %v553
    %v566 = vmax.f32 %v550, %v554
    %v567 = vmax.f32 %v563, %v555
    %v568 = vmax.f32 %v564, %v556
    %v569 = vmax.f32 %v565, %v557
    %v570 = vmax.f32 %v566, %v558
    %v571 = vmax.f32 %v567, %v559
    %v572 = vmax.f32 %v568, %v560
    %v573 = vmax.f32 %v569, %v561
    %v574 = vmax.f32 %v570, %v562
    %v575 = vmax.f32 %v571, %v572
    %v576 = vmax.f32 %v573, %v574
    %v577 = vmax.f32 %v575, %v576
    %v578 = vrot.slane %v577, 4
    %v579 = vmax.f32 %v577, %v578
    %v580 = vrot.slane %v579, 2
    %v581 = vmax.f32 %v579, %v580
    %v582 = vrot.slane %v581, 1
    %v583 = vmax.f32 %v581, %v582
    %vm584 = vcmp.eq.f32.partialorder %v547, %v583
    %vm585 = vcmp.eq.f32.partialorder %v548, %v583
    %vm586 = vcmp.eq.f32.partialorder %v549, %v583
    %vm587 = vcmp.eq.f32.partialorder %v550, %v583
    %vm588 = vcmp.eq.f32.partialorder %v551, %v583
    %vm589 = vcmp.eq.f32.partialorder %v552, %v583
    %vm590 = vcmp.eq.f32.partialorder %v553, %v583
    %vm591 = vcmp.eq.f32.partialorder %v554, %v583
    %vm592 = vcmp.eq.f32.partialorder %v555, %v583
    %vm593 = vcmp.eq.f32.partialorder %v556, %v583
    %vm594 = vcmp.eq.f32.partialorder %v557, %v583
    %vm595 = vcmp.eq.f32.partialorder %v558, %v583
    %vm596 = vcmp.eq.f32.partialorder %v559, %v583
    %vm597 = vcmp.eq.f32.partialorder %v560, %v583
    %vm598 = vcmp.eq.f32.partialorder %v561, %v583
    %vm599 = vcmp.eq.f32.partialorder %v562, %v583
    %v600 = vsel %vm584, %v439, 3e+38
    %v601 = vsel %vm585, %v440, 3e+38
    %v602 = vsel %vm586, %v441, 3e+38
    %v603 = vsel %vm587, %v442, 3e+38
    %v604 = vsel %vm588, %v443, 3e+38
    %v605 = vsel %vm589, %v444, 3e+38
    %v606 = vsel %vm590, %v445, 3e+38
    %v607 = vsel %vm591, %v446, 3e+38
    %v608 = vsel %vm592, %v447, 3e+38
    %v609 = vsel %vm593, %v448, 3e+38
    %v610 = vsel %vm594, %v449, 3e+38
    %v611 = vsel %vm595, %v450, 3e+38
    %v612 = vsel %vm596, %v451, 3e+38
    %v613 = vsel %vm597, %v452, 3e+38
    %v614 = vsel %vm598, %v453, 3e+38
    %v615 = vsel %vm599, %v454, 3e+38
    %v616 = vmin.f32 %v600, %v604
    %v617 = vmin.f32 %v601, %v605
    %v618 = vmin.f32 %v602, %v606
    %v619 = vmin.f32 %v603, %v607
    %v620 = vmin.f32 %v616, %v608
    %v621 = vmin.f32 %v617, %v609
    %v622 = vmin.f32 %v618, %v610
    %v623 = vmin.f32 %v619, %v611
    %v624 = vmin.f32 %v620, %v612
    %v625 = vmin.f32 %v621, %v613
    %v626 = vmin.f32 %v622, %v614
    %v627 = vmin.f32 %v623, %v615
    %v628 = vmin.f32 %v624, %v625
    %v629 = vmin.f32 %v626, %v627
    %v630 = vmin.f32 %v628, %v629
    %v631 = vrot.slane %v630, 4
    %v632 = vmin.f32 %v630, %v631
    %v633 = vrot.slane %v632, 2
    %v634 = vmin.f32 %v632, %v633
    %v635 = vrot.slane %v634, 1
    %v636 = vmin.f32 %v634, %v635
    %637 = vst [vmem:[#allocation3 + $0xb] sm:$0x1] %v583
    %638 = vst [vmem:[#allocation4 + $0xb] sm:$0x1] %v636
    %vm639 = vcmp.eq.f32.partialorder %v439, %v636
    %vm640 = vcmp.eq.f32.partialorder %v440, %v636
    %vm641 = vcmp.eq.f32.partialorder %v441, %v636
    %vm642 = vcmp.eq.f32.partialorder %v442, %v636
    %vm643 = vcmp.eq.f32.partialorder %v443, %v636
    %vm644 = vcmp.eq.f32.partialorder %v444, %v636
    %vm645 = vcmp.eq.f32.partialorder %v445, %v636
    %vm646 = vcmp.eq.f32.partialorder %v446, %v636
    %vm647 = vcmp.eq.f32.partialorder %v447, %v636
    %vm648 = vcmp.eq.f32.partialorder %v448, %v636
    %vm649 = vcmp.eq.f32.partialorder %v449, %v636
    %vm650 = vcmp.eq.f32.partialorder %v450, %v636
    %vm651 = vcmp.eq.f32.partialorder %v451, %v636
    %vm652 = vcmp.eq.f32.partialorder %v452, %v636
    %vm653 = vcmp.eq.f32.partialorder %v453, %v636
    %vm654 = vcmp.eq.f32.partialorder %v454, %v636
    %v655 = vsel %vm639, -inf, %v547
    %v656 = vsel %vm640, -inf, %v548
    %v657 = vsel %vm641, -inf, %v549
    %v658 = vsel %vm642, -inf, %v550
    %v659 = vsel %vm643, -inf, %v551
    %v660 = vsel %vm644, -inf, %v552
    %v661 = vsel %vm645, -inf, %v553
    %v662 = vsel %vm646, -inf, %v554
    %v663 = vsel %vm647, -inf, %v555
    %v664 = vsel %vm648, -inf, %v556
    %v665 = vsel %vm649, -inf, %v557
    %v666 = vsel %vm650, -inf, %v558
    %v667 = vsel %vm651, -inf, %v559
    %v668 = vsel %vm652, -inf, %v560
    %v669 = vsel %vm653, -inf, %v561
    %v670 = vsel %vm654, -inf, %v562
    %v671 = vmax.f32 %v655, %v659
    %v672 = vmax.f32 %v656, %v660
    %v673 = vmax.f32 %v657, %v661
    %v674 = vmax.f32 %v658, %v662
    %v675 = vmax.f32 %v671, %v663
    %v676 = vmax.f32 %v672, %v664
    %v677 = vmax.f32 %v673, %v665
    %v678 = vmax.f32 %v674, %v666
    %v679 = vmax.f32 %v675, %v667
    %v680 = vmax.f32 %v676, %v668
    %v681 = vmax.f32 %v677, %v669
    %v682 = vmax.f32 %v678, %v670
    %v683 = vmax.f32 %v679, %v680
    %v684 = vmax.f32 %v681, %v682
    %v685 = vmax.f32 %v683, %v684
    %v686 = vrot.slane %v685, 4
    %v687 = vmax.f32 %v685, %v686
    %v688 = vrot.slane %v687, 2
    %v689 = vmax.f32 %v687, %v688
    %v690 = vrot.slane %v689, 1
    %v691 = vmax.f32 %v689, %v690
    %vm692 = vcmp.eq.f32.partialorder %v655, %v691
    %vm693 = vcmp.eq.f32.partialorder %v656, %v691
    %vm694 = vcmp.eq.f32.partialorder %v657, %v691
    %vm695 = vcmp.eq.f32.partialorder %v658, %v691
    %vm696 = vcmp.eq.f32.partialorder %v659, %v691
    %vm697 = vcmp.eq.f32.partialorder %v660, %v691
    %vm698 = vcmp.eq.f32.partialorder %v661, %v691
    %vm699 = vcmp.eq.f32.partialorder %v662, %v691
    %vm700 = vcmp.eq.f32.partialorder %v663, %v691
    %vm701 = vcmp.eq.f32.partialorder %v664, %v691
    %vm702 = vcmp.eq.f32.partialorder %v665, %v691
    %vm703 = vcmp.eq.f32.partialorder %v666, %v691
    %vm704 = vcmp.eq.f32.partialorder %v667, %v691
    %vm705 = vcmp.eq.f32.partialorder %v668, %v691
    %vm706 = vcmp.eq.f32.partialorder %v669, %v691
    %vm707 = vcmp.eq.f32.partialorder %v670, %v691
    %v708 = vsel %vm692, %v439, 3e+38
    %v709 = vsel %vm693, %v440, 3e+38
    %v710 = vsel %vm694, %v441, 3e+38
    %v711 = vsel %vm695, %v442, 3e+38
    %v712 = vsel %vm696, %v443, 3e+38
    %v713 = vsel %vm697, %v444, 3e+38
    %v714 = vsel %vm698, %v445, 3e+38
    %v715 = vsel %vm699, %v446, 3e+38
    %v716 = vsel %vm700, %v447, 3e+38
    %v717 = vsel %vm701, %v448, 3e+38
    %v718 = vsel %vm702, %v449, 3e+38
    %v719 = vsel %vm703, %v450, 3e+38
    %v720 = vsel %vm704, %v451, 3e+38
    %v721 = vsel %vm705, %v452, 3e+38
    %v722 = vsel %vm706, %v453, 3e+38
    %v723 = vsel %vm707, %v454, 3e+38
    %v724 = vmin.f32 %v708, %v712
    %v725 = vmin.f32 %v709, %v713
    %v726 = vmin.f32 %v710, %v714
    %v727 = vmin.f32 %v711, %v715
    %v728 = vmin.f32 %v724, %v716
    %v729 = vmin.f32 %v725, %v717
    %v730 = vmin.f32 %v726, %v718
    %v731 = vmin.f32 %v727, %v719
    %v732 = vmin.f32 %v728, %v720
    %v733 = vmin.f32 %v729, %v721
    %v734 = vmin.f32 %v730, %v722
    %v735 = vmin.f32 %v731, %v723
    %v736 = vmin.f32 %v732, %v733
    %v737 = vmin.f32 %v734, %v735
    %v738 = vmin.f32 %v736, %v737
    %v739 = vrot.slane %v738, 4
    %v740 = vmin.f32 %v738, %v739
    %v741 = vrot.slane %v740, 2
    %v742 = vmin.f32 %v740, %v741
    %v743 = vrot.slane %v742, 1
    %v744 = vmin.f32 %v742, %v743
    %745 = vst [vmem:[#allocation3 + $0xc] sm:$0x1] %v691
    %746 = vst [vmem:[#allocation4 + $0xc] sm:$0x1] %v744
    %vm747 = vcmp.eq.f32.partialorder %v439, %v744
    %vm748 = vcmp.eq.f32.partialorder %v440, %v744
    %vm749 = vcmp.eq.f32.partialorder %v441, %v744
    %vm750 = vcmp.eq.f32.partialorder %v442, %v744
    %vm751 = vcmp.eq.f32.partialorder %v443, %v744
    %vm752 = vcmp.eq.f32.partialorder %v444, %v744
    %vm753 = vcmp.eq.f32.partialorder %v445, %v744
    %vm754 = vcmp.eq.f32.partialorder %v446, %v744
    %vm755 = vcmp.eq.f32.partialorder %v447, %v744
    %vm756 = vcmp.eq.f32.partialorder %v448, %v744
    %vm757 = vcmp.eq.f32.partialorder %v449, %v744
    %vm758 = vcmp.eq.f32.partialorder %v450, %v744
    %vm759 = vcmp.eq.f32.partialorder %v451, %v744
    %vm760 = vcmp.eq.f32.partialorder %v452, %v744
    %vm761 = vcmp.eq.f32.partialorder %v453, %v744
    %vm762 = vcmp.eq.f32.partialorder %v454, %v744
    %v763 = vsel %vm747, -inf, %v655
    %v764 = vsel %vm748, -inf, %v656
    %v765 = vsel %vm749, -inf, %v657
    %v766 = vsel %vm750, -inf, %v658
    %v767 = vsel %vm751, -inf, %v659
    %v768 = vsel %vm752, -inf, %v660
    %v769 = vsel %vm753, -inf, %v661
    %v770 = vsel %vm754, -inf, %v662
    %v771 = vsel %vm755, -inf, %v663
    %v772 = vsel %vm756, -inf, %v664
    %v773 = vsel %vm757, -inf, %v665
    %v774 = vsel %vm758, -inf, %v666
    %v775 = vsel %vm759, -inf, %v667
    %v776 = vsel %vm760, -inf, %v668
    %v777 = vsel %vm761, -inf, %v669
    %v778 = vsel %vm762, -inf, %v670
    %v779 = vmax.f32 %v763, %v767
    %v780 = vmax.f32 %v764, %v768
    %v781 = vmax.f32 %v765, %v769
    %v782 = vmax.f32 %v766, %v770
    %v783 = vmax.f32 %v779, %v771
    %v784 = vmax.f32 %v780, %v772
    %v785 = vmax.f32 %v781, %v773
    %v786 = vmax.f32 %v782, %v774
    %v787 = vmax.f32 %v783, %v775
    %v788 = vmax.f32 %v784, %v776
    %v789 = vmax.f32 %v785, %v777
    %v790 = vmax.f32 %v786, %v778
    %v791 = vmax.f32 %v787, %v788
    %v792 = vmax.f32 %v789, %v790
    %v793 = vmax.f32 %v791, %v792
    %v794 = vrot.slane %v793, 4
    %v795 = vmax.f32 %v793, %v794
    %v796 = vrot.slane %v795, 2
    %v797 = vmax.f32 %v795, %v796
    %v798 = vrot.slane %v797, 1
    %v799 = vmax.f32 %v797, %v798
    %vm800 = vcmp.eq.f32.partialorder %v763, %v799
    %vm801 = vcmp.eq.f32.partialorder %v764, %v799
    %vm802 = vcmp.eq.f32.partialorder %v765, %v799
    %vm803 = vcmp.eq.f32.partialorder %v766, %v799
    %vm804 = vcmp.eq.f32.partialorder %v767, %v799
    %vm805 = vcmp.eq.f32.partialorder %v768, %v799
    %vm806 = vcmp.eq.f32.partialorder %v769, %v799
    %vm807 = vcmp.eq.f32.partialorder %v770, %v799
    %vm808 = vcmp.eq.f32.partialorder %v771, %v799
    %vm809 = vcmp.eq.f32.partialorder %v772, %v799
    %vm810 = vcmp.eq.f32.partialorder %v773, %v799
    %vm811 = vcmp.eq.f32.partialorder %v774, %v799
    %vm812 = vcmp.eq.f32.partialorder %v775, %v799
    %vm813 = vcmp.eq.f32.partialorder %v776, %v799
    %vm814 = vcmp.eq.f32.partialorder %v777, %v799
    %vm815 = vcmp.eq.f32.partialorder %v778, %v799
    %v816 = vsel %vm800, %v439, 3e+38
    %v817 = vsel %vm801, %v440, 3e+38
    %v818 = vsel %vm802, %v441, 3e+38
    %v819 = vsel %vm803, %v442, 3e+38
    %v820 = vsel %vm804, %v443, 3e+38
    %v821 = vsel %vm805, %v444, 3e+38
    %v822 = vsel %vm806, %v445, 3e+38
    %v823 = vsel %vm807, %v446, 3e+38
    %v824 = vsel %vm808, %v447, 3e+38
    %v825 = vsel %vm809, %v448, 3e+38
    %v826 = vsel %vm810, %v449, 3e+38
    %v827 = vsel %vm811, %v450, 3e+38
    %v828 = vsel %vm812, %v451, 3e+38
    %v829 = vsel %vm813, %v452, 3e+38
    %v830 = vsel %vm814, %v453, 3e+38
    %v831 = vsel %vm815, %v454, 3e+38
    %v832 = vmin.f32 %v816, %v820
    %v833 = vmin.f32 %v817, %v821
    %v834 = vmin.f32 %v818, %v822
    %v835 = vmin.f32 %v819, %v823
    %v836 = vmin.f32 %v832, %v824
    %v837 = vmin.f32 %v833, %v825
    %v838 = vmin.f32 %v834, %v826
    %v839 = vmin.f32 %v835, %v827
    %v840 = vmin.f32 %v836, %v828
    %v841 = vmin.f32 %v837, %v829
    %v842 = vmin.f32 %v838, %v830
    %v843 = vmin.f32 %v839, %v831
    %v844 = vmin.f32 %v840, %v841
    %v845 = vmin.f32 %v842, %v843
    %v846 = vmin.f32 %v844, %v845
    %v847 = vrot.slane %v846, 4
    %v848 = vmin.f32 %v846, %v847
    %v849 = vrot.slane %v848, 2
    %v850 = vmin.f32 %v848, %v849
    %v851 = vrot.slane %v850, 1
    %v852 = vmin.f32 %v850, %v851
    %853 = vst [vmem:[#allocation3 + $0xd] sm:$0x1] %v799
    %854 = vst [vmem:[#allocation4 + $0xd] sm:$0x1] %v852
    %vm855 = vcmp.eq.f32.partialorder %v439, %v852
    %vm856 = vcmp.eq.f32.partialorder %v440, %v852
    %vm857 = vcmp.eq.f32.partialorder %v441, %v852
    %vm858 = vcmp.eq.f32.partialorder %v442, %v852
    %vm859 = vcmp.eq.f32.partialorder %v443, %v852
    %vm860 = vcmp.eq.f32.partialorder %v444, %v852
    %vm861 = vcmp.eq.f32.partialorder %v445, %v852
    %vm862 = vcmp.eq.f32.partialorder %v446, %v852
    %vm863 = vcmp.eq.f32.partialorder %v447, %v852
    %vm864 = vcmp.eq.f32.partialorder %v448, %v852
    %vm865 = vcmp.eq.f32.partialorder %v449, %v852
    %vm866 = vcmp.eq.f32.partialorder %v450, %v852
    %vm867 = vcmp.eq.f32.partialorder %v451, %v852
    %vm868 = vcmp.eq.f32.partialorder %v452, %v852
    %vm869 = vcmp.eq.f32.partialorder %v453, %v852
    %vm870 = vcmp.eq.f32.partialorder %v454, %v852
    %v871 = vsel %vm855, -inf, %v763
    %v872 = vsel %vm856, -inf, %v764
    %v873 = vsel %vm857, -inf, %v765
    %v874 = vsel %vm858, -inf, %v766
    %v875 = vsel %vm859, -inf, %v767
    %v876 = vsel %vm860, -inf, %v768
    %v877 = vsel %vm861, -inf, %v769
    %v878 = vsel %vm862, -inf, %v770
    %v879 = vsel %vm863, -inf, %v771
    %v880 = vsel %vm864, -inf, %v772
    %v881 = vsel %vm865, -inf, %v773
    %v882 = vsel %vm866, -inf, %v774
    %v883 = vsel %vm867, -inf, %v775
    %v884 = vsel %vm868, -inf, %v776
    %v885 = vsel %vm869, -inf, %v777
    %v886 = vsel %vm870, -inf, %v778
    %v887 = vmax.f32 %v871, %v875
    %v888 = vmax.f32 %v872, %v876
    %v889 = vmax.f32 %v873, %v877
    %v890 = vmax.f32 %v874, %v878
    %v891 = vmax.f32 %v887, %v879
    %v892 = vmax.f32 %v888, %v880
    %v893 = vmax.f32 %v889, %v881
    %v894 = vmax.f32 %v890, %v882
    %v895 = vmax.f32 %v891, %v883
    %v896 = vmax.f32 %v892, %v884
    %v897 = vmax.f32 %v893, %v885
    %v898 = vmax.f32 %v894, %v886
    %v899 = vmax.f32 %v895, %v896
    %v900 = vmax.f32 %v897, %v898
    %v901 = vmax.f32 %v899, %v900
    %v902 = vrot.slane %v901, 4
    %v903 = vmax.f32 %v901, %v902
    %v904 = vrot.slane %v903, 2
    %v905 = vmax.f32 %v903, %v904
    %v906 = vrot.slane %v905, 1
    %v907 = vmax.f32 %v905, %v906
    %vm908 = vcmp.eq.f32.partialorder %v871, %v907
    %vm909 = vcmp.eq.f32.partialorder %v872, %v907
    %vm910 = vcmp.eq.f32.partialorder %v873, %v907
    %vm911 = vcmp.eq.f32.partialorder %v874, %v907
    %vm912 = vcmp.eq.f32.partialorder %v875, %v907
    %vm913 = vcmp.eq.f32.partialorder %v876, %v907
    %vm914 = vcmp.eq.f32.partialorder %v877, %v907
    %vm915 = vcmp.eq.f32.partialorder %v878, %v907
    %vm916 = vcmp.eq.f32.partialorder %v879, %v907
    %vm917 = vcmp.eq.f32.partialorder %v880, %v907
    %vm918 = vcmp.eq.f32.partialorder %v881, %v907
    %vm919 = vcmp.eq.f32.partialorder %v882, %v907
    %vm920 = vcmp.eq.f32.partialorder %v883, %v907
    %vm921 = vcmp.eq.f32.partialorder %v884, %v907
    %vm922 = vcmp.eq.f32.partialorder %v885, %v907
    %vm923 = vcmp.eq.f32.partialorder %v886, %v907
    %v924 = vsel %vm908, %v439, 3e+38
    %v925 = vsel %vm909, %v440, 3e+38
    %v926 = vsel %vm910, %v441, 3e+38
    %v927 = vsel %vm911, %v442, 3e+38
    %v928 = vsel %vm912, %v443, 3e+38
    %v929 = vsel %vm913, %v444, 3e+38
    %v930 = vsel %vm914, %v445, 3e+38
    %v931 = vsel %vm915, %v446, 3e+38
    %v932 = vsel %vm916, %v447, 3e+38
    %v933 = vsel %vm917, %v448, 3e+38
    %v934 = vsel %vm918, %v449, 3e+38
    %v935 = vsel %vm919, %v450, 3e+38
    %v936 = vsel %vm920, %v451, 3e+38
    %v937 = vsel %vm921, %v452, 3e+38
    %v938 = vsel %vm922, %v453, 3e+38
    %v939 = vsel %vm923, %v454, 3e+38
    %v940 = vmin.f32 %v924, %v928
    %v941 = vmin.f32 %v925, %v929
    %v942 = vmin.f32 %v926, %v930
    %v943 = vmin.f32 %v927, %v931
    %v944 = vmin.f32 %v940, %v932
    %v945 = vmin.f32 %v941, %v933
    %v946 = vmin.f32 %v942, %v934
    %v947 = vmin.f32 %v943, %v935
    %v948 = vmin.f32 %v944, %v936
    %v949 = vmin.f32 %v945, %v937
    %v950 = vmin.f32 %v946, %v938
    %v951 = vmin.f32 %v947, %v939
    %v952 = vmin.f32 %v948, %v949
    %v953 = vmin.f32 %v950, %v951
    %v954 = vmin.f32 %v952, %v953
    %v955 = vrot.slane %v954, 4
    %v956 = vmin.f32 %v954, %v955
    %v957 = vrot.slane %v956, 2
    %v958 = vmin.f32 %v956, %v957
    %v959 = vrot.slane %v958, 1
    %v960 = vmin.f32 %v958, %v959
    %961 = vst [vmem:[#allocation3 + $0xe] sm:$0x1] %v907
    %962 = vst [vmem:[#allocation4 + $0xe] sm:$0x1] %v960
    %vm963 = vcmp.eq.f32.partialorder %v439, %v960
    %vm964 = vcmp.eq.f32.partialorder %v440, %v960
    %vm965 = vcmp.eq.f32.partialorder %v441, %v960
    %vm966 = vcmp.eq.f32.partialorder %v442, %v960
    %vm967 = vcmp.eq.f32.partialorder %v443, %v960
    %vm968 = vcmp.eq.f32.partialorder %v444, %v960
    %vm969 = vcmp.eq.f32.partialorder %v445, %v960
    %vm970 = vcmp.eq.f32.partialorder %v446, %v960
    %vm971 = vcmp.eq.f32.partialorder %v447, %v960
    %vm972 = vcmp.eq.f32.partialorder %v448, %v960
    %vm973 = vcmp.eq.f32.partialorder %v449, %v960
    %vm974 = vcmp.eq.f32.partialorder %v450, %v960
    %vm975 = vcmp.eq.f32.partialorder %v451, %v960
    %vm976 = vcmp.eq.f32.partialorder %v452, %v960
    %vm977 = vcmp.eq.f32.partialorder %v453, %v960
    %vm978 = vcmp.eq.f32.partialorder %v454, %v960
    %v979 = vsel %vm963, -inf, %v871
    %v980 = vsel %vm964, -inf, %v872
    %v981 = vsel %vm965, -inf, %v873
    %v982 = vsel %vm966, -inf, %v874
    %v983 = vsel %vm967, -inf, %v875
    %v984 = vsel %vm968, -inf, %v876
    %v985 = vsel %vm969, -inf, %v877
    %v986 = vsel %vm970, -inf, %v878
    %v987 = vsel %vm971, -inf, %v879
    %v988 = vsel %vm972, -inf, %v880
    %v989 = vsel %vm973, -inf, %v881
    %v990 = vsel %vm974, -inf, %v882
    %v991 = vsel %vm975, -inf, %v883
    %v992 = vsel %vm976, -inf, %v884
    %v993 = vsel %vm977, -inf, %v885
    %v994 = vsel %vm978, -inf, %v886
    %v995 = vmax.f32 %v979, %v983
    %v996 = vmax.f32 %v980, %v984
    %v997 = vmax.f32 %v981, %v985
    %v998 = vmax.f32 %v982, %v986
    %v999 = vmax.f32 %v995, %v987
    %v1000 = vmax.f32 %v996, %v988
    %v1001 = vmax.f32 %v997, %v989
    %v1002 = vmax.f32 %v998, %v990
    %v1003 = vmax.f32 %v999, %v991
    %v1004 = vmax.f32 %v1000, %v992
    %v1005 = vmax.f32 %v1001, %v993
    %v1006 = vmax.f32 %v1002, %v994
    %v1007 = vmax.f32 %v1003, %v1004
    %v1008 = vmax.f32 %v1005, %v1006
    %v1009 = vmax.f32 %v1007, %v1008
    %v1010 = vrot.slane %v1009, 4
    %v1011 = vmax.f32 %v1009, %v1010
    %v1012 = vrot.slane %v1011, 2
    %v1013 = vmax.f32 %v1011, %v1012
    %v1014 = vrot.slane %v1013, 1
    %v1015 = vmax.f32 %v1013, %v1014
    %vm1016 = vcmp.eq.f32.partialorder %v979, %v1015
    %vm1017 = vcmp.eq.f32.partialorder %v980, %v1015
    %vm1018 = vcmp.eq.f32.partialorder %v981, %v1015
    %vm1019 = vcmp.eq.f32.partialorder %v982, %v1015
    %vm1020 = vcmp.eq.f32.partialorder %v983, %v1015
    %vm1021 = vcmp.eq.f32.partialorder %v984, %v1015
    %vm1022 = vcmp.eq.f32.partialorder %v985, %v1015
    %vm1023 = vcmp.eq.f32.partialorder %v986, %v1015
    %vm1024 = vcmp.eq.f32.partialorder %v987, %v1015
    %vm1025 = vcmp.eq.f32.partialorder %v988, %v1015
    %vm1026 = vcmp.eq.f32.partialorder %v989, %v1015
    %vm1027 = vcmp.eq.f32.partialorder %v990, %v1015
    %vm1028 = vcmp.eq.f32.partialorder %v991, %v1015
    %vm1029 = vcmp.eq.f32.partialorder %v992, %v1015
    %vm1030 = vcmp.eq.f32.partialorder %v993, %v1015
    %vm1031 = vcmp.eq.f32.partialorder %v994, %v1015
    %v1032 = vsel %vm1016, %v439, 3e+38
    %v1033 = vsel %vm1017, %v440, 3e+38
    %v1034 = vsel %vm1018, %v441, 3e+38
    %v1035 = vsel %vm1019, %v442, 3e+38
    %v1036 = vsel %vm1020, %v443, 3e+38
    %v1037 = vsel %vm1021, %v444, 3e+38
    %v1038 = vsel %vm1022, %v445, 3e+38
    %v1039 = vsel %vm1023, %v446, 3e+38
    %v1040 = vsel %vm1024, %v447, 3e+38
    %v1041 = vsel %vm1025, %v448, 3e+38
    %v1042 = vsel %vm1026, %v449, 3e+38
    %v1043 = vsel %vm1027, %v450, 3e+38
    %v1044 = vsel %vm1028, %v451, 3e+38
    %v1045 = vsel %vm1029, %v452, 3e+38
    %v1046 = vsel %vm1030, %v453, 3e+38
    %v1047 = vsel %vm1031, %v454, 3e+38
    %v1048 = vmin.f32 %v1032, %v1036
    %v1049 = vmin.f32 %v1033, %v1037
    %v1050 = vmin.f32 %v1034, %v1038
    %v1051 = vmin.f32 %v1035, %v1039
    %v1052 = vmin.f32 %v1048, %v1040
    %v1053 = vmin.f32 %v1049, %v1041
    %v1054 = vmin.f32 %v1050, %v1042
    %v1055 = vmin.f32 %v1051, %v1043
    %v1056 = vmin.f32 %v1052, %v1044
    %v1057 = vmin.f32 %v1053, %v1045
    %v1058 = vmin.f32 %v1054, %v1046
    %v1059 = vmin.f32 %v1055, %v1047
    %v1060 = vmin.f32 %v1056, %v1057
    %v1061 = vmin.f32 %v1058, %v1059
    %v1062 = vmin.f32 %v1060, %v1061
    %v1063 = vrot.slane %v1062, 4
    %v1064 = vmin.f32 %v1062, %v1063
    %v1065 = vrot.slane %v1064, 2
    %v1066 = vmin.f32 %v1064, %v1065
    %v1067 = vrot.slane %v1066, 1
    %v1068 = vmin.f32 %v1066, %v1067
    %1069 = vst [vmem:[#allocation3 + $0xf] sm:$0x1] %v1015
    %1070 = vst [vmem:[#allocation4 + $0xf] sm:$0x1] %v1068
    %vm1071 = vcmp.eq.f32.partialorder %v439, %v1068
    %vm1072 = vcmp.eq.f32.partialorder %v440, %v1068
    %vm1073 = vcmp.eq.f32.partialorder %v441, %v1068
    %vm1074 = vcmp.eq.f32.partialorder %v442, %v1068
    %vm1075 = vcmp.eq.f32.partialorder %v443, %v1068
    %vm1076 = vcmp.eq.f32.partialorder %v444, %v1068
    %vm1077 = vcmp.eq.f32.partialorder %v445, %v1068
    %vm1078 = vcmp.eq.f32.partialorder %v446, %v1068
    %vm1079 = vcmp.eq.f32.partialorder %v447, %v1068
    %vm1080 = vcmp.eq.f32.partialorder %v448, %v1068
    %vm1081 = vcmp.eq.f32.partialorder %v449, %v1068
    %vm1082 = vcmp.eq.f32.partialorder %v450, %v1068
    %vm1083 = vcmp.eq.f32.partialorder %v451, %v1068
    %vm1084 = vcmp.eq.f32.partialorder %v452, %v1068
    %vm1085 = vcmp.eq.f32.partialorder %v453, %v1068
    %vm1086 = vcmp.eq.f32.partialorder %v454, %v1068
    %v1087 = vsel %vm1071, -inf, %v979
    %v1088 = vsel %vm1072, -inf, %v980
    %v1089 = vsel %vm1073, -inf, %v981
    %v1090 = vsel %vm1074, -inf, %v982
    %v1091 = vsel %vm1075, -inf, %v983
    %v1092 = vsel %vm1076, -inf, %v984
    %v1093 = vsel %vm1077, -inf, %v985
    %v1094 = vsel %vm1078, -inf, %v986
    %v1095 = vsel %vm1079, -inf, %v987
    %v1096 = vsel %vm1080, -inf, %v988
    %v1097 = vsel %vm1081, -inf, %v989
    %v1098 = vsel %vm1082, -inf, %v990
    %v1099 = vsel %vm1083, -inf, %v991
    %v1100 = vsel %vm1084, -inf, %v992
    %v1101 = vsel %vm1085, -inf, %v993
    %v1102 = vsel %vm1086, -inf, %v994
    %v1103 = vmax.f32 %v1087, %v1091
    %v1104 = vmax.f32 %v1088, %v1092
    %v1105 = vmax.f32 %v1089, %v1093
    %v1106 = vmax.f32 %v1090, %v1094
    %v1107 = vmax.f32 %v1103, %v1095
    %v1108 = vmax.f32 %v1104, %v1096
    %v1109 = vmax.f32 %v1105, %v1097
    %v1110 = vmax.f32 %v1106, %v1098
    %v1111 = vmax.f32 %v1107, %v1099
    %v1112 = vmax.f32 %v1108, %v1100
    %v1113 = vmax.f32 %v1109, %v1101
    %v1114 = vmax.f32 %v1110, %v1102
    %v1115 = vmax.f32 %v1111, %v1112
    %v1116 = vmax.f32 %v1113, %v1114
    %v1117 = vmax.f32 %v1115, %v1116
    %v1118 = vrot.slane %v1117, 4
    %v1119 = vmax.f32 %v1117, %v1118
    %v1120 = vrot.slane %v1119, 2
    %v1121 = vmax.f32 %v1119, %v1120
    %v1122 = vrot.slane %v1121, 1
    %v1123 = vmax.f32 %v1121, %v1122
    %vm1124 = vcmp.eq.f32.partialorder %v1087, %v1123
    %vm1125 = vcmp.eq.f32.partialorder %v1088, %v1123
    %vm1126 = vcmp.eq.f32.partialorder %v1089, %v1123
    %vm1127 = vcmp.eq.f32.partialorder %v1090, %v1123
    %vm1128 = vcmp.eq.f32.partialorder %v1091, %v1123
    %vm1129 = vcmp.eq.f32.partialorder %v1092, %v1123
    %vm1130 = vcmp.eq.f32.partialorder %v1093, %v1123
    %vm1131 = vcmp.eq.f32.partialorder %v1094, %v1123
    %vm1132 = vcmp.eq.f32.partialorder %v1095, %v1123
    %vm1133 = vcmp.eq.f32.partialorder %v1096, %v1123
    %vm1134 = vcmp.eq.f32.partialorder %v1097, %v1123
    %vm1135 = vcmp.eq.f32.partialorder %v1098, %v1123
    %vm1136 = vcmp.eq.f32.partialorder %v1099, %v1123
    %vm1137 = vcmp.eq.f32.partialorder %v1100, %v1123
    %vm1138 = vcmp.eq.f32.partialorder %v1101, %v1123
    %vm1139 = vcmp.eq.f32.partialorder %v1102, %v1123
    %v1140 = vsel %vm1124, %v439, 3e+38
    %v1141 = vsel %vm1125, %v440, 3e+38
    %v1142 = vsel %vm1126, %v441, 3e+38
    %v1143 = vsel %vm1127, %v442, 3e+38
    %v1144 = vsel %vm1128, %v443, 3e+38
    %v1145 = vsel %vm1129, %v444, 3e+38
    %v1146 = vsel %vm1130, %v445, 3e+38
    %v1147 = vsel %vm1131, %v446, 3e+38
    %v1148 = vsel %vm1132, %v447, 3e+38
    %v1149 = vsel %vm1133, %v448, 3e+38
    %v1150 = vsel %vm1134, %v449, 3e+38
    %v1151 = vsel %vm1135, %v450, 3e+38
    %v1152 = vsel %vm1136, %v451, 3e+38
    %v1153 = vsel %vm1137, %v452, 3e+38
    %v1154 = vsel %vm1138, %v453, 3e+38
    %v1155 = vsel %vm1139, %v454, 3e+38
    %v1156 = vmin.f32 %v1140, %v1144
    %v1157 = vmin.f32 %v1141, %v1145
    %v1158 = vmin.f32 %v1142, %v1146
    %v1159 = vmin.f32 %v1143, %v1147
    %v1160 = vmin.f32 %v1156, %v1148
    %v1161 = vmin.f32 %v1157, %v1149
    %v1162 = vmin.f32 %v1158, %v1150
    %v1163 = vmin.f32 %v1159, %v1151
    %v1164 = vmin.f32 %v1160, %v1152
    %v1165 = vmin.f32 %v1161, %v1153
    %v1166 = vmin.f32 %v1162, %v1154
    %v1167 = vmin.f32 %v1163, %v1155
    %v1168 = vmin.f32 %v1164, %v1165
    %v1169 = vmin.f32 %v1166, %v1167
    %v1170 = vmin.f32 %v1168, %v1169
    %v1171 = vrot.slane %v1170, 4
    %v1172 = vmin.f32 %v1170, %v1171
    %v1173 = vrot.slane %v1172, 2
    %v1174 = vmin.f32 %v1172, %v1173
    %v1175 = vrot.slane %v1174, 1
    %v1176 = vmin.f32 %v1174, %v1175
    %1177 = vst [vmem:[#allocation3 + $0x10] sm:$0x1] %v1123
    %1178 = vst [vmem:[#allocation4 + $0x10] sm:$0x1] %v1176
    %vm1179 = vcmp.eq.f32.partialorder %v439, %v1176
    %vm1180 = vcmp.eq.f32.partialorder %v440, %v1176
    %vm1181 = vcmp.eq.f32.partialorder %v441, %v1176
    %vm1182 = vcmp.eq.f32.partialorder %v442, %v1176
    %vm1183 = vcmp.eq.f32.partialorder %v443, %v1176
    %vm1184 = vcmp.eq.f32.partialorder %v444, %v1176
    %vm1185 = vcmp.eq.f32.partialorder %v445, %v1176
    %vm1186 = vcmp.eq.f32.partialorder %v446, %v1176
    %vm1187 = vcmp.eq.f32.partialorder %v447, %v1176
    %vm1188 = vcmp.eq.f32.partialorder %v448, %v1176
    %vm1189 = vcmp.eq.f32.partialorder %v449, %v1176
    %vm1190 = vcmp.eq.f32.partialorder %v450, %v1176
    %vm1191 = vcmp.eq.f32.partialorder %v451, %v1176
    %vm1192 = vcmp.eq.f32.partialorder %v452, %v1176
    %vm1193 = vcmp.eq.f32.partialorder %v453, %v1176
    %vm1194 = vcmp.eq.f32.partialorder %v454, %v1176
    %v1195 = vsel %vm1179, -inf, %v1087
    %v1196 = vsel %vm1180, -inf, %v1088
    %v1197 = vsel %vm1181, -inf, %v1089
    %v1198 = vsel %vm1182, -inf, %v1090
    %v1199 = vsel %vm1183, -inf, %v1091
    %v1200 = vsel %vm1184, -inf, %v1092
    %v1201 = vsel %vm1185, -inf, %v1093
    %v1202 = vsel %vm1186, -inf, %v1094
    %v1203 = vsel %vm1187, -inf, %v1095
    %v1204 = vsel %vm1188, -inf, %v1096
    %v1205 = vsel %vm1189, -inf, %v1097
    %v1206 = vsel %vm1190, -inf, %v1098
    %v1207 = vsel %vm1191, -inf, %v1099
    %v1208 = vsel %vm1192, -inf, %v1100
    %v1209 = vsel %vm1193, -inf, %v1101
    %v1210 = vsel %vm1194, -inf, %v1102
    %v1211 = vmax.f32 %v1195, %v1199
    %v1212 = vmax.f32 %v1196, %v1200
    %v1213 = vmax.f32 %v1197, %v1201
    %v1214 = vmax.f32 %v1198, %v1202
    %v1215 = vmax.f32 %v1211, %v1203
    %v1216 = vmax.f32 %v1212, %v1204
    %v1217 = vmax.f32 %v1213, %v1205
    %v1218 = vmax.f32 %v1214, %v1206
    %v1219 = vmax.f32 %v1215, %v1207
    %v1220 = vmax.f32 %v1216, %v1208
    %v1221 = vmax.f32 %v1217, %v1209
    %v1222 = vmax.f32 %v1218, %v1210
    %v1223 = vmax.f32 %v1219, %v1220
    %v1224 = vmax.f32 %v1221, %v1222
    %v1225 = vmax.f32 %v1223, %v1224
    %v1226 = vrot.slane %v1225, 4
    %v1227 = vmax.f32 %v1225, %v1226
    %v1228 = vrot.slane %v1227, 2
    %v1229 = vmax.f32 %v1227, %v1228
    %v1230 = vrot.slane %v1229, 1
    %v1231 = vmax.f32 %v1229, %v1230
    %vm1232 = vcmp.eq.f32.partialorder %v1195, %v1231
    %vm1233 = vcmp.eq.f32.partialorder %v1196, %v1231
    %vm1234 = vcmp.eq.f32.partialorder %v1197, %v1231
    %vm1235 = vcmp.eq.f32.partialorder %v1198, %v1231
    %vm1236 = vcmp.eq.f32.partialorder %v1199, %v1231
    %vm1237 = vcmp.eq.f32.partialorder %v1200, %v1231
    %vm1238 = vcmp.eq.f32.partialorder %v1201, %v1231
    %vm1239 = vcmp.eq.f32.partialorder %v1202, %v1231
    %vm1240 = vcmp.eq.f32.partialorder %v1203, %v1231
    %vm1241 = vcmp.eq.f32.partialorder %v1204, %v1231
    %vm1242 = vcmp.eq.f32.partialorder %v1205, %v1231
    %vm1243 = vcmp.eq.f32.partialorder %v1206, %v1231
    %vm1244 = vcmp.eq.f32.partialorder %v1207, %v1231
    %vm1245 = vcmp.eq.f32.partialorder %v1208, %v1231
    %vm1246 = vcmp.eq.f32.partialorder %v1209, %v1231
    %vm1247 = vcmp.eq.f32.partialorder %v1210, %v1231
    %v1248 = vsel %vm1232, %v439, 3e+38
    %v1249 = vsel %vm1233, %v440, 3e+38
    %v1250 = vsel %vm1234, %v441, 3e+38
    %v1251 = vsel %vm1235, %v442, 3e+38
    %v1252 = vsel %vm1236, %v443, 3e+38
    %v1253 = vsel %vm1237, %v444, 3e+38
    %v1254 = vsel %vm1238, %v445, 3e+38
    %v1255 = vsel %vm1239, %v446, 3e+38
    %v1256 = vsel %vm1240, %v447, 3e+38
    %v1257 = vsel %vm1241, %v448, 3e+38
    %v1258 = vsel %vm1242, %v449, 3e+38
    %v1259 = vsel %vm1243, %v450, 3e+38
    %v1260 = vsel %vm1244, %v451, 3e+38
    %v1261 = vsel %vm1245, %v452, 3e+38
    %v1262 = vsel %vm1246, %v453, 3e+38
    %v1263 = vsel %vm1247, %v454, 3e+38
    %v1264 = vmin.f32 %v1248, %v1252
    %v1265 = vmin.f32 %v1249, %v1253
    %v1266 = vmin.f32 %v1250, %v1254
    %v1267 = vmin.f32 %v1251, %v1255
    %v1268 = vmin.f32 %v1264, %v1256
    %v1269 = vmin.f32 %v1265, %v1257
    %v1270 = vmin.f32 %v1266, %v1258
    %v1271 = vmin.f32 %v1267, %v1259
    %v1272 = vmin.f32 %v1268, %v1260
    %v1273 = vmin.f32 %v1269, %v1261
    %v1274 = vmin.f32 %v1270, %v1262
    %v1275 = vmin.f32 %v1271, %v1263
    %v1276 = vmin.f32 %v1272, %v1273
    %v1277 = vmin.f32 %v1274, %v1275
    %v1278 = vmin.f32 %v1276, %v1277
    %v1279 = vrot.slane %v1278, 4
    %v1280 = vmin.f32 %v1278, %v1279
    %v1281 = vrot.slane %v1280, 2
    %v1282 = vmin.f32 %v1280, %v1281
    %v1283 = vrot.slane %v1282, 1
    %v1284 = vmin.f32 %v1282, %v1283
    %1285 = vst [vmem:[#allocation3 + $0x11] sm:$0x1] %v1231
    %1286 = vst [vmem:[#allocation4 + $0x11] sm:$0x1] %v1284
    %vm1287 = vcmp.eq.f32.partialorder %v439, %v1284
    %vm1288 = vcmp.eq.f32.partialorder %v440, %v1284
    %vm1289 = vcmp.eq.f32.partialorder %v441, %v1284
    %vm1290 = vcmp.eq.f32.partialorder %v442, %v1284
    %vm1291 = vcmp.eq.f32.partialorder %v443, %v1284
    %vm1292 = vcmp.eq.f32.partialorder %v444, %v1284
    %vm1293 = vcmp.eq.f32.partialorder %v445, %v1284
    %vm1294 = vcmp.eq.f32.partialorder %v446, %v1284
    %vm1295 = vcmp.eq.f32.partialorder %v447, %v1284
    %vm1296 = vcmp.eq.f32.partialorder %v448, %v1284
    %vm1297 = vcmp.eq.f32.partialorder %v449, %v1284
    %vm1298 = vcmp.eq.f32.partialorder %v450, %v1284
    %vm1299 = vcmp.eq.f32.partialorder %v451, %v1284
    %vm1300 = vcmp.eq.f32.partialorder %v452, %v1284
    %vm1301 = vcmp.eq.f32.partialorder %v453, %v1284
    %vm1302 = vcmp.eq.f32.partialorder %v454, %v1284
    %v1303 = vsel %vm1287, -inf, %v1195
    %v1304 = vsel %vm1288, -inf, %v1196
    %v1305 = vsel %vm1289, -inf, %v1197
    %v1306 = vsel %vm1290, -inf, %v1198
    %v1307 = vsel %vm1291, -inf, %v1199
    %v1308 = vsel %vm1292, -inf, %v1200
    %v1309 = vsel %vm1293, -inf, %v1201
    %v1310 = vsel %vm1294, -inf, %v1202
    %v1311 = vsel %vm1295, -inf, %v1203
    %v1312 = vsel %vm1296, -inf, %v1204
    %v1313 = vsel %vm1297, -inf, %v1205
    %v1314 = vsel %vm1298, -inf, %v1206
    %v1315 = vsel %vm1299, -inf, %v1207
    %v1316 = vsel %vm1300, -inf, %v1208
    %v1317 = vsel %vm1301, -inf, %v1209
    %v1318 = vsel %vm1302, -inf, %v1210
    %v1319 = vmax.f32 %v1303, %v1307
    %v1320 = vmax.f32 %v1304, %v1308
    %v1321 = vmax.f32 %v1305, %v1309
    %v1322 = vmax.f32 %v1306, %v1310
    %v1323 = vmax.f32 %v1319, %v1311
    %v1324 = vmax.f32 %v1320, %v1312
    %v1325 = vmax.f32 %v1321, %v1313
    %v1326 = vmax.f32 %v1322, %v1314
    %v1327 = vmax.f32 %v1323, %v1315
    %v1328 = vmax.f32 %v1324, %v1316
    %v1329 = vmax.f32 %v1325, %v1317
    %v1330 = vmax.f32 %v1326, %v1318
    %v1331 = vmax.f32 %v1327, %v1328
    %v1332 = vmax.f32 %v1329, %v1330
    %v1333 = vmax.f32 %v1331, %v1332
    %v1334 = vrot.slane %v1333, 4
    %v1335 = vmax.f32 %v1333, %v1334
    %v1336 = vrot.slane %v1335, 2
    %v1337 = vmax.f32 %v1335, %v1336
    %v1338 = vrot.slane %v1337, 1
    %v1339 = vmax.f32 %v1337, %v1338
    %vm1340 = vcmp.eq.f32.partialorder %v1303, %v1339
    %vm1341 = vcmp.eq.f32.partialorder %v1304, %v1339
    %vm1342 = vcmp.eq.f32.partialorder %v1305, %v1339
    %vm1343 = vcmp.eq.f32.partialorder %v1306, %v1339
    %vm1344 = vcmp.eq.f32.partialorder %v1307, %v1339
    %vm1345 = vcmp.eq.f32.partialorder %v1308, %v1339
    %vm1346 = vcmp.eq.f32.partialorder %v1309, %v1339
    %vm1347 = vcmp.eq.f32.partialorder %v1310, %v1339
    %vm1348 = vcmp.eq.f32.partialorder %v1311, %v1339
    %vm1349 = vcmp.eq.f32.partialorder %v1312, %v1339
    %vm1350 = vcmp.eq.f32.partialorder %v1313, %v1339
    %vm1351 = vcmp.eq.f32.partialorder %v1314, %v1339
    %vm1352 = vcmp.eq.f32.partialorder %v1315, %v1339
    %vm1353 = vcmp.eq.f32.partialorder %v1316, %v1339
    %vm1354 = vcmp.eq.f32.partialorder %v1317, %v1339
    %vm1355 = vcmp.eq.f32.partialorder %v1318, %v1339
    %v1356 = vsel %vm1340, %v439, 3e+38
    %v1357 = vsel %vm1341, %v440, 3e+38
    %v1358 = vsel %vm1342, %v441, 3e+38
    %v1359 = vsel %vm1343, %v442, 3e+38
    %v1360 = vsel %vm1344, %v443, 3e+38
    %v1361 = vsel %vm1345, %v444, 3e+38
    %v1362 = vsel %vm1346, %v445, 3e+38
    %v1363 = vsel %vm1347, %v446, 3e+38
    %v1364 = vsel %vm1348, %v447, 3e+38
    %v1365 = vsel %vm1349, %v448, 3e+38
    %v1366 = vsel %vm1350, %v449, 3e+38
    %v1367 = vsel %vm1351, %v450, 3e+38
    %v1368 = vsel %vm1352, %v451, 3e+38
    %v1369 = vsel %vm1353, %v452, 3e+38
    %v1370 = vsel %vm1354, %v453, 3e+38
    %v1371 = vsel %vm1355, %v454, 3e+38
    %v1372 = vmin.f32 %v1356, %v1360
    %v1373 = vmin.f32 %v1357, %v1361
    %v1374 = vmin.f32 %v1358, %v1362
    %v1375 = vmin.f32 %v1359, %v1363
    %v1376 = vmin.f32 %v1372, %v1364
    %v1377 = vmin.f32 %v1373, %v1365
    %v1378 = vmin.f32 %v1374, %v1366
    %v1379 = vmin.f32 %v1375, %v1367
    %v1380 = vmin.f32 %v1376, %v1368
    %v1381 = vmin.f32 %v1377, %v1369
    %v1382 = vmin.f32 %v1378, %v1370
    %v1383 = vmin.f32 %v1379, %v1371
    %v1384 = vmin.f32 %v1380, %v1381
    %v1385 = vmin.f32 %v1382, %v1383
    %v1386 = vmin.f32 %v1384, %v1385
    %v1387 = vrot.slane %v1386, 4
    %v1388 = vmin.f32 %v1386, %v1387
    %v1389 = vrot.slane %v1388, 2
    %v1390 = vmin.f32 %v1388, %v1389
    %v1391 = vrot.slane %v1390, 1
    %v1392 = vmin.f32 %v1390, %v1391
    %1393 = vst [vmem:[#allocation3 + $0x12] sm:$0x1] %v1339
    %1394 = vst [vmem:[#allocation4 + $0x12] sm:$0x1] %v1392
    %vm1395 = vcmp.eq.f32.partialorder %v439, %v1392
    %vm1396 = vcmp.eq.f32.partialorder %v440, %v1392
    %vm1397 = vcmp.eq.f32.partialorder %v441, %v1392
    %vm1398 = vcmp.eq.f32.partialorder %v442, %v1392
    %vm1399 = vcmp.eq.f32.partialorder %v443, %v1392
    %vm1400 = vcmp.eq.f32.partialorder %v444, %v1392
    %vm1401 = vcmp.eq.f32.partialorder %v445, %v1392
    %vm1402 = vcmp.eq.f32.partialorder %v446, %v1392
    %vm1403 = vcmp.eq.f32.partialorder %v447, %v1392
    %vm1404 = vcmp.eq.f32.partialorder %v448, %v1392
    %vm1405 = vcmp.eq.f32.partialorder %v449, %v1392
    %vm1406 = vcmp.eq.f32.partialorder %v450, %v1392
    %vm1407 = vcmp.eq.f32.partialorder %v451, %v1392
    %vm1408 = vcmp.eq.f32.partialorder %v452, %v1392
    %vm1409 = vcmp.eq.f32.partialorder %v453, %v1392
    %vm1410 = vcmp.eq.f32.partialorder %v454, %v1392
    %v1411 = vsel %vm1395, -inf, %v1303
    %v1412 = vsel %vm1396, -inf, %v1304
    %v1413 = vsel %vm1397, -inf, %v1305
    %v1414 = vsel %vm1398, -inf, %v1306
    %v1415 = vsel %vm1399, -inf, %v1307
    %v1416 = vsel %vm1400, -inf, %v1308
    %v1417 = vsel %vm1401, -inf, %v1309
    %v1418 = vsel %vm1402, -inf, %v1310
    %v1419 = vsel %vm1403, -inf, %v1311
    %v1420 = vsel %vm1404, -inf, %v1312
    %v1421 = vsel %vm1405, -inf, %v1313
    %v1422 = vsel %vm1406, -inf, %v1314
    %v1423 = vsel %vm1407, -inf, %v1315
    %v1424 = vsel %vm1408, -inf, %v1316
    %v1425 = vsel %vm1409, -inf, %v1317
    %v1426 = vsel %vm1410, -inf, %v1318
    %v1427 = vmax.f32 %v1411, %v1415
    %v1428 = vmax.f32 %v1412, %v1416
    %v1429 = vmax.f32 %v1413, %v1417
    %v1430 = vmax.f32 %v1414, %v1418
    %v1431 = vmax.f32 %v1427, %v1419
    %v1432 = vmax.f32 %v1428, %v1420
    %v1433 = vmax.f32 %v1429, %v1421
    %v1434 = vmax.f32 %v1430, %v1422
    %v1435 = vmax.f32 %v1431, %v1423
    %v1436 = vmax.f32 %v1432, %v1424
    %v1437 = vmax.f32 %v1433, %v1425
    %v1438 = vmax.f32 %v1434, %v1426
    %v1439 = vmax.f32 %v1435, %v1436
    %v1440 = vmax.f32 %v1437, %v1438
    %v1441 = vmax.f32 %v1439, %v1440
    %v1442 = vrot.slane %v1441, 4
    %v1443 = vmax.f32 %v1441, %v1442
    %v1444 = vrot.slane %v1443, 2
    %v1445 = vmax.f32 %v1443, %v1444
    %v1446 = vrot.slane %v1445, 1
    %v1447 = vmax.f32 %v1445, %v1446
    %vm1448 = vcmp.eq.f32.partialorder %v1411, %v1447
    %vm1449 = vcmp.eq.f32.partialorder %v1412, %v1447
    %vm1450 = vcmp.eq.f32.partialorder %v1413, %v1447
    %vm1451 = vcmp.eq.f32.partialorder %v1414, %v1447
    %vm1452 = vcmp.eq.f32.partialorder %v1415, %v1447
    %vm1453 = vcmp.eq.f32.partialorder %v1416, %v1447
    %vm1454 = vcmp.eq.f32.partialorder %v1417, %v1447
    %vm1455 = vcmp.eq.f32.partialorder %v1418, %v1447
    %vm1456 = vcmp.eq.f32.partialorder %v1419, %v1447
    %vm1457 = vcmp.eq.f32.partialorder %v1420, %v1447
    %vm1458 = vcmp.eq.f32.partialorder %v1421, %v1447
    %vm1459 = vcmp.eq.f32.partialorder %v1422, %v1447
    %vm1460 = vcmp.eq.f32.partialorder %v1423, %v1447
    %vm1461 = vcmp.eq.f32.partialorder %v1424, %v1447
    %vm1462 = vcmp.eq.f32.partialorder %v1425, %v1447
    %vm1463 = vcmp.eq.f32.partialorder %v1426, %v1447
    %v1464 = vsel %vm1448, %v439, 3e+38
    %v1465 = vsel %vm1449, %v440, 3e+38
    %v1466 = vsel %vm1450, %v441, 3e+38
    %v1467 = vsel %vm1451, %v442, 3e+38
    %v1468 = vsel %vm1452, %v443, 3e+38
    %v1469 = vsel %vm1453, %v444, 3e+38
    %v1470 = vsel %vm1454, %v445, 3e+38
    %v1471 = vsel %vm1455, %v446, 3e+38
    %v1472 = vsel %vm1456, %v447, 3e+38
    %v1473 = vsel %vm1457, %v448, 3e+38
    %v1474 = vsel %vm1458, %v449, 3e+38
    %v1475 = vsel %vm1459, %v450, 3e+38
    %v1476 = vsel %vm1460, %v451, 3e+38
    %v1477 = vsel %vm1461, %v452, 3e+38
    %v1478 = vsel %vm1462, %v453, 3e+38
    %v1479 = vsel %vm1463, %v454, 3e+38
    %v1480 = vmin.f32 %v1464, %v1468
    %v1481 = vmin.f32 %v1465, %v1469
    %v1482 = vmin.f32 %v1466, %v1470
    %v1483 = vmin.f32 %v1467, %v1471
    %v1484 = vmin.f32 %v1480, %v1472
    %v1485 = vmin.f32 %v1481, %v1473
    %v1486 = vmin.f32 %v1482, %v1474
    %v1487 = vmin.f32 %v1483, %v1475
    %v1488 = vmin.f32 %v1484, %v1476
    %v1489 = vmin.f32 %v1485, %v1477
    %v1490 = vmin.f32 %v1486, %v1478
    %v1491 = vmin.f32 %v1487, %v1479
    %v1492 = vmin.f32 %v1488, %v1489
    %v1493 = vmin.f32 %v1490, %v1491
    %v1494 = vmin.f32 %v1492, %v1493
    %v1495 = vrot.slane %v1494, 4
    %v1496 = vmin.f32 %v1494, %v1495
    %v1497 = vrot.slane %v1496, 2
    %v1498 = vmin.f32 %v1496, %v1497
    %v1499 = vrot.slane %v1498, 1
    %v1500 = vmin.f32 %v1498, %v1499
    %1501 = vst [vmem:[#allocation3 + $0x13] sm:$0x1] %v1447
    %1502 = vst [vmem:[#allocation4 + $0x13] sm:$0x1] %v1500
    %v1503 = vld [vmem:[#allocation3] sm:$0xff]
    %v1504 = vld [vmem:[#allocation3 + $0x8] sm:$0xff]
    %v1505 = vld [vmem:[#allocation3 + $0x10] sm:$0xf]
    %v1506 = vld [vmem:[#allocation4] sm:$0xff]
    %v1507 = vld [vmem:[#allocation4 + $0x8] sm:$0xff]
    %v1508 = vld [vmem:[#allocation4 + $0x10] sm:$0xf]
    %vm1509 = vcmask 1043456
    %v1510 = vsel %vm1509, %v1505, -inf
    %v1511 = vmax.f32 %v1503, %v1504
    %v1512 = vmax.f32 %v1511, %v1510
    %v1513 = vrot.slane %v1512, 4
    %v1514 = vmax.f32 %v1512, %v1513
    %v1515 = vrot.slane %v1514, 2
    %v1516 = vmax.f32 %v1514, %v1515
    %v1517 = vrot.slane %v1516, 1
    %v1518 = vmax.f32 %v1516, %v1517
    %vm1519 = vcmp.eq.f32.partialorder %v1503, %v1518
    %vm1520 = vcmp.eq.f32.partialorder %v1504, %v1518
    %vm1521 = vcmp.eq.f32.partialorder %v1505, %v1518
    %v1522 = vsel %vm1519, %v1506, 3e+38
    %v1523 = vsel %vm1520, %v1507, 3e+38
    %v1524 = vsel %vm1521, %v1508, 3e+38
    %v1525 = vsel %vm1509, %v1524, inf
    %v1526 = vmin.f32 %v1522, %v1523
    %v1527 = vmin.f32 %v1526, %v1525
    %v1528 = vrot.slane %v1527, 4
    %v1529 = vmin.f32 %v1527, %v1528
    %v1530 = vrot.slane %v1529, 2
    %v1531 = vmin.f32 %v1529, %v1530
    %v1532 = vrot.slane %v1531, 1
    %v1533 = vmin.f32 %v1531, %v1532
    %1534 = vst [vmem:[#allocation3] sm:$0x1] %v1518
    %1535 = vst [vmem:[#allocation4] sm:$0x1] %v1533
    %vm1536 = vcmp.eq.f32.partialorder %v1506, %v1533
    %vm1537 = vcmp.eq.f32.partialorder %v1507, %v1533
    %vm1538 = vcmp.eq.f32.partialorder %v1508, %v1533
    %v1539 = vsel %vm1536, -inf, %v1503
    %v1540 = vsel %vm1537, -inf, %v1504
    %v1541 = vsel %vm1538, -inf, %v1505
    %v1542 = vsel %vm1509, %v1541, -inf
    %v1543 = vmax.f32 %v1539, %v1540
    %v1544 = vmax.f32 %v1543, %v1542
    %v1545 = vrot.slane %v1544, 4
    %v1546 = vmax.f32 %v1544, %v1545
    %v1547 = vrot.slane %v1546, 2
    %v1548 = vmax.f32 %v1546, %v1547
    %v1549 = vrot.slane %v1548, 1
    %v1550 = vmax.f32 %v1548, %v1549
    %vm1551 = vcmp.eq.f32.partialorder %v1539, %v1550
    %vm1552 = vcmp.eq.f32.partialorder %v1540, %v1550
    %vm1553 = vcmp.eq.f32.partialorder %v1541, %v1550
    %v1554 = vsel %vm1551, %v1506, 3e+38
    %v1555 = vsel %vm1552, %v1507, 3e+38
    %v1556 = vsel %vm1553, %v1508, 3e+38
    %v1557 = vsel %vm1509, %v1556, inf
    %v1558 = vmin.f32 %v1554, %v1555
    %v1559 = vmin.f32 %v1558, %v1557
    %v1560 = vrot.slane %v1559, 4
    %v1561 = vmin.f32 %v1559, %v1560
    %v1562 = vrot.slane %v1561, 2
    %v1563 = vmin.f32 %v1561, %v1562
    %v1564 = vrot.slane %v1563, 1
    %v1565 = vmin.f32 %v1563, %v1564
    %1566 = vst [vmem:[#allocation3 + $0x1] sm:$0x1] %v1550
    %1567 = vst [vmem:[#allocation4 + $0x1] sm:$0x1] %v1565
    %vm1568 = vcmp.eq.f32.partialorder %v1506, %v1565
    %vm1569 = vcmp.eq.f32.partialorder %v1507, %v1565
    %vm1570 = vcmp.eq.f32.partialorder %v1508, %v1565
    %v1571 = vsel %vm1568, -inf, %v1539
    %v1572 = vsel %vm1569, -inf, %v1540
    %v1573 = vsel %vm1570, -inf, %v1541
    %v1574 = vsel %vm1509, %v1573, -inf
    %v1575 = vmax.f32 %v1571, %v1572
    %v1576 = vmax.f32 %v1575, %v1574
    %v1577 = vrot.slane %v1576, 4
    %v1578 = vmax.f32 %v1576, %v1577
    %v1579 = vrot.slane %v1578, 2
    %v1580 = vmax.f32 %v1578, %v1579
    %v1581 = vrot.slane %v1580, 1
    %v1582 = vmax.f32 %v1580, %v1581
    %vm1583 = vcmp.eq.f32.partialorder %v1571, %v1582
    %vm1584 = vcmp.eq.f32.partialorder %v1572, %v1582
    %vm1585 = vcmp.eq.f32.partialorder %v1573, %v1582
    %v1586 = vsel %vm1583, %v1506, 3e+38
    %v1587 = vsel %vm1584, %v1507, 3e+38
    %v1588 = vsel %vm1585, %v1508, 3e+38
    %v1589 = vsel %vm1509, %v1588, inf
    %v1590 = vmin.f32 %v1586, %v1587
    %v1591 = vmin.f32 %v1590, %v1589
    %v1592 = vrot.slane %v1591, 4
    %v1593 = vmin.f32 %v1591, %v1592
    %v1594 = vrot.slane %v1593, 2
    %v1595 = vmin.f32 %v1593, %v1594
    %v1596 = vrot.slane %v1595, 1
    %v1597 = vmin.f32 %v1595, %v1596
    %1598 = vst [vmem:[#allocation3 + $0x2] sm:$0x1] %v1582
    %1599 = vst [vmem:[#allocation4 + $0x2] sm:$0x1] %v1597
    %vm1600 = vcmp.eq.f32.partialorder %v1506, %v1597
    %vm1601 = vcmp.eq.f32.partialorder %v1507, %v1597
    %vm1602 = vcmp.eq.f32.partialorder %v1508, %v1597
    %v1603 = vsel %vm1600, -inf, %v1571
    %v1604 = vsel %vm1601, -inf, %v1572
    %v1605 = vsel %vm1602, -inf, %v1573
    %v1606 = vsel %vm1509, %v1605, -inf
    %v1607 = vmax.f32 %v1603, %v1604
    %v1608 = vmax.f32 %v1607, %v1606
    %v1609 = vrot.slane %v1608, 4
    %v1610 = vmax.f32 %v1608, %v1609
    %v1611 = vrot.slane %v1610, 2
    %v1612 = vmax.f32 %v1610, %v1611
    %v1613 = vrot.slane %v1612, 1
    %v1614 = vmax.f32 %v1612, %v1613
    %vm1615 = vcmp.eq.f32.partialorder %v1603, %v1614
    %vm1616 = vcmp.eq.f32.partialorder %v1604, %v1614
    %vm1617 = vcmp.eq.f32.partialorder %v1605, %v1614
    %v1618 = vsel %vm1615, %v1506, 3e+38
    %v1619 = vsel %vm1616, %v1507, 3e+38
    %v1620 = vsel %vm1617, %v1508, 3e+38
    %v1621 = vsel %vm1509, %v1620, inf
    %v1622 = vmin.f32 %v1618, %v1619
    %v1623 = vmin.f32 %v1622, %v1621
    %v1624 = vrot.slane %v1623, 4
    %v1625 = vmin.f32 %v1623, %v1624
    %v1626 = vrot.slane %v1625, 2
    %v1627 = vmin.f32 %v1625, %v1626
    %v1628 = vrot.slane %v1627, 1
    %v1629 = vmin.f32 %v1627, %v1628
    %1630 = vst [vmem:[#allocation3 + $0x3] sm:$0x1] %v1614
    %1631 = vst [vmem:[#allocation4 + $0x3] sm:$0x1] %v1629
    %vm1632 = vcmp.eq.f32.partialorder %v1506, %v1629
    %vm1633 = vcmp.eq.f32.partialorder %v1507, %v1629
    %vm1634 = vcmp.eq.f32.partialorder %v1508, %v1629
    %v1635 = vsel %vm1632, -inf, %v1603
    %v1636 = vsel %vm1633, -inf, %v1604
    %v1637 = vsel %vm1634, -inf, %v1605
    %v1638 = vsel %vm1509, %v1637, -inf
    %v1639 = vmax.f32 %v1635, %v1636
    %v1640 = vmax.f32 %v1639, %v1638
    %v1641 = vrot.slane %v1640, 4
    %v1642 = vmax.f32 %v1640, %v1641
    %v1643 = vrot.slane %v1642, 2
    %v1644 = vmax.f32 %v1642, %v1643
    %v1645 = vrot.slane %v1644, 1
    %v1646 = vmax.f32 %v1644, %v1645
    %vm1647 = vcmp.eq.f32.partialorder %v1635, %v1646
    %vm1648 = vcmp.eq.f32.partialorder %v1636, %v1646
    %vm1649 = vcmp.eq.f32.partialorder %v1637, %v1646
    %v1650 = vsel %vm1647, %v1506, 3e+38
    %v1651 = vsel %vm1648, %v1507, 3e+38
    %v1652 = vsel %vm1649, %v1508, 3e+38
    %v1653 = vsel %vm1509, %v1652, inf
    %v1654 = vmin.f32 %v1650, %v1651
    %v1655 = vmin.f32 %v1654, %v1653
    %v1656 = vrot.slane %v1655, 4
    %v1657 = vmin.f32 %v1655, %v1656
    %v1658 = vrot.slane %v1657, 2
    %v1659 = vmin.f32 %v1657, %v1658
    %v1660 = vrot.slane %v1659, 1
    %v1661 = vmin.f32 %v1659, %v1660
    %1662 = vst [vmem:[#allocation3 + $0x4] sm:$0x1] %v1646
    %1663 = vst [vmem:[#allocation4 + $0x4] sm:$0x1] %v1661
    %vm1664 = vcmp.eq.f32.partialorder %v1506, %v1661
    %vm1665 = vcmp.eq.f32.partialorder %v1507, %v1661
    %vm1666 = vcmp.eq.f32.partialorder %v1508, %v1661
    %v1667 = vsel %vm1664, -inf, %v1635
    %v1668 = vsel %vm1665, -inf, %v1636
    %v1669 = vsel %vm1666, -inf, %v1637
    %v1670 = vsel %vm1509, %v1669, -inf
    %v1671 = vmax.f32 %v1667, %v1668
    %v1672 = vmax.f32 %v1671, %v1670
    %v1673 = vrot.slane %v1672, 4
    %v1674 = vmax.f32 %v1672, %v1673
    %v1675 = vrot.slane %v1674, 2
    %v1676 = vmax.f32 %v1674, %v1675
    %v1677 = vrot.slane %v1676, 1
    %v1678 = vmax.f32 %v1676, %v1677
    %vm1679 = vcmp.eq.f32.partialorder %v1667, %v1678
    %vm1680 = vcmp.eq.f32.partialorder %v1668, %v1678
    %vm1681 = vcmp.eq.f32.partialorder %v1669, %v1678
    %v1682 = vsel %vm1679, %v1506, 3e+38
    %v1683 = vsel %vm1680, %v1507, 3e+38
    %v1684 = vsel %vm1681, %v1508, 3e+38
    %v1685 = vsel %vm1509, %v1684, inf
    %v1686 = vmin.f32 %v1682, %v1683
    %v1687 = vmin.f32 %v1686, %v1685
    %v1688 = vrot.slane %v1687, 4
    %v1689 = vmin.f32 %v1687, %v1688
    %v1690 = vrot.slane %v1689, 2
    %v1691 = vmin.f32 %v1689, %v1690
    %v1692 = vrot.slane %v1691, 1
    %v1693 = vmin.f32 %v1691, %v1692
    %1694 = vst [vmem:[#allocation3 + $0x5] sm:$0x1] %v1678
    %1695 = vst [vmem:[#allocation4 + $0x5] sm:$0x1] %v1693
    %vm1696 = vcmp.eq.f32.partialorder %v1506, %v1693
    %vm1697 = vcmp.eq.f32.partialorder %v1507, %v1693
    %vm1698 = vcmp.eq.f32.partialorder %v1508, %v1693
    %v1699 = vsel %vm1696, -inf, %v1667
    %v1700 = vsel %vm1697, -inf, %v1668
    %v1701 = vsel %vm1698, -inf, %v1669
    %v1702 = vsel %vm1509, %v1701, -inf
    %v1703 = vmax.f32 %v1699, %v1700
    %v1704 = vmax.f32 %v1703, %v1702
    %v1705 = vrot.slane %v1704, 4
    %v1706 = vmax.f32 %v1704, %v1705
    %v1707 = vrot.slane %v1706, 2
    %v1708 = vmax.f32 %v1706, %v1707
    %v1709 = vrot.slane %v1708, 1
    %v1710 = vmax.f32 %v1708, %v1709
    %vm1711 = vcmp.eq.f32.partialorder %v1699, %v1710
    %vm1712 = vcmp.eq.f32.partialorder %v1700, %v1710
    %vm1713 = vcmp.eq.f32.partialorder %v1701, %v1710
    %v1714 = vsel %vm1711, %v1506, 3e+38
    %v1715 = vsel %vm1712, %v1507, 3e+38
    %v1716 = vsel %vm1713, %v1508, 3e+38
    %v1717 = vsel %vm1509, %v1716, inf
    %v1718 = vmin.f32 %v1714, %v1715
    %v1719 = vmin.f32 %v1718, %v1717
    %v1720 = vrot.slane %v1719, 4
    %v1721 = vmin.f32 %v1719, %v1720
    %v1722 = vrot.slane %v1721, 2
    %v1723 = vmin.f32 %v1721, %v1722
    %v1724 = vrot.slane %v1723, 1
    %v1725 = vmin.f32 %v1723, %v1724
    %1726 = vst [vmem:[#allocation3 + $0x6] sm:$0x1] %v1710
    %1727 = vst [vmem:[#allocation4 + $0x6] sm:$0x1] %v1725
    %vm1728 = vcmp.eq.f32.partialorder %v1506, %v1725
    %vm1729 = vcmp.eq.f32.partialorder %v1507, %v1725
    %vm1730 = vcmp.eq.f32.partialorder %v1508, %v1725
    %v1731 = vsel %vm1728, -inf, %v1699
    %v1732 = vsel %vm1729, -inf, %v1700
    %v1733 = vsel %vm1730, -inf, %v1701
    %v1734 = vsel %vm1509, %v1733, -inf
    %v1735 = vmax.f32 %v1731, %v1732
    %v1736 = vmax.f32 %v1735, %v1734
    %v1737 = vrot.slane %v1736, 4
    %v1738 = vmax.f32 %v1736, %v1737
    %v1739 = vrot.slane %v1738, 2
    %v1740 = vmax.f32 %v1738, %v1739
    %v1741 = vrot.slane %v1740, 1
    %v1742 = vmax.f32 %v1740, %v1741
    %vm1743 = vcmp.eq.f32.partialorder %v1731, %v1742
    %vm1744 = vcmp.eq.f32.partialorder %v1732, %v1742
    %vm1745 = vcmp.eq.f32.partialorder %v1733, %v1742
    %v1746 = vsel %vm1743, %v1506, 3e+38
    %v1747 = vsel %vm1744, %v1507, 3e+38
    %v1748 = vsel %vm1745, %v1508, 3e+38
    %v1749 = vsel %vm1509, %v1748, inf
    %v1750 = vmin.f32 %v1746, %v1747
    %v1751 = vmin.f32 %v1750, %v1749
    %v1752 = vrot.slane %v1751, 4
    %v1753 = vmin.f32 %v1751, %v1752
    %v1754 = vrot.slane %v1753, 2
    %v1755 = vmin.f32 %v1753, %v1754
    %v1756 = vrot.slane %v1755, 1
    %v1757 = vmin.f32 %v1755, %v1756
    %1758 = vst [vmem:[#allocation3 + $0x7] sm:$0x1] %v1742
    %1759 = vst [vmem:[#allocation4 + $0x7] sm:$0x1] %v1757
    %vm1760 = vcmp.eq.f32.partialorder %v1506, %v1757
    %vm1761 = vcmp.eq.f32.partialorder %v1507, %v1757
    %vm1762 = vcmp.eq.f32.partialorder %v1508, %v1757
    %v1763 = vsel %vm1760, -inf, %v1731
    %v1764 = vsel %vm1761, -inf, %v1732
    %v1765 = vsel %vm1762, -inf, %v1733
    %v1766 = vsel %vm1509, %v1765, -inf
    %v1767 = vmax.f32 %v1763, %v1764
    %v1768 = vmax.f32 %v1767, %v1766
    %v1769 = vrot.slane %v1768, 4
    %v1770 = vmax.f32 %v1768, %v1769
    %v1771 = vrot.slane %v1770, 2
    %v1772 = vmax.f32 %v1770, %v1771
    %v1773 = vrot.slane %v1772, 1
    %v1774 = vmax.f32 %v1772, %v1773
    %vm1775 = vcmp.eq.f32.partialorder %v1763, %v1774
    %vm1776 = vcmp.eq.f32.partialorder %v1764, %v1774
    %vm1777 = vcmp.eq.f32.partialorder %v1765, %v1774
    %v1778 = vsel %vm1775, %v1506, 3e+38
    %v1779 = vsel %vm1776, %v1507, 3e+38
    %v1780 = vsel %vm1777, %v1508, 3e+38
    %v1781 = vsel %vm1509, %v1780, inf
    %v1782 = vmin.f32 %v1778, %v1779
    %v1783 = vmin.f32 %v1782, %v1781
    %v1784 = vrot.slane %v1783, 4
    %v1785 = vmin.f32 %v1783, %v1784
    %v1786 = vrot.slane %v1785, 2
    %v1787 = vmin.f32 %v1785, %v1786
    %v1788 = vrot.slane %v1787, 1
    %v1789 = vmin.f32 %v1787, %v1788
    %1790 = vst [vmem:[#allocation3 + $0x8] sm:$0x1] %v1774
    %1791 = vst [vmem:[#allocation4 + $0x8] sm:$0x1] %v1789
    %vm1792 = vcmp.eq.f32.partialorder %v1506, %v1789
    %vm1793 = vcmp.eq.f32.partialorder %v1507, %v1789
    %vm1794 = vcmp.eq.f32.partialorder %v1508, %v1789
    %v1795 = vsel %vm1792, -inf, %v1763
    %v1796 = vsel %vm1793, -inf, %v1764
    %v1797 = vsel %vm1794, -inf, %v1765
    %v1798 = vsel %vm1509, %v1797, -inf
    %v1799 = vmax.f32 %v1795, %v1796
    %v1800 = vmax.f32 %v1799, %v1798
    %v1801 = vrot.slane %v1800, 4
    %v1802 = vmax.f32 %v1800, %v1801
    %v1803 = vrot.slane %v1802, 2
    %v1804 = vmax.f32 %v1802, %v1803
    %v1805 = vrot.slane %v1804, 1
    %v1806 = vmax.f32 %v1804, %v1805
    %vm1807 = vcmp.eq.f32.partialorder %v1795, %v1806
    %vm1808 = vcmp.eq.f32.partialorder %v1796, %v1806
    %vm1809 = vcmp.eq.f32.partialorder %v1797, %v1806
    %v1810 = vsel %vm1807, %v1506, 3e+38
    %v1811 = vsel %vm1808, %v1507, 3e+38
    %v1812 = vsel %vm1809, %v1508, 3e+38
    %v1813 = vsel %vm1509, %v1812, inf
    %v1814 = vmin.f32 %v1810, %v1811
    %v1815 = vmin.f32 %v1814, %v1813
    %v1816 = vrot.slane %v1815, 4
    %v1817 = vmin.f32 %v1815, %v1816
    %v1818 = vrot.slane %v1817, 2
    %v1819 = vmin.f32 %v1817, %v1818
    %v1820 = vrot.slane %v1819, 1
    %v1821 = vmin.f32 %v1819, %v1820
    %1822 = vst [vmem:[#allocation3 + $0x9] sm:$0x1] %v1806
    %1823 = vst [vmem:[#allocation4 + $0x9] sm:$0x1] %v1821
    // Predicated region
    $region14: #{tpu_custom_call.1} parent=1 // pred_check
      %p1824 = pneg %p16
    $region15: #{tpu_custom_call.1} parent=1 // pred_check_branch
      %1826 = sbr.rel (%p1824) target = $region17
    $region16: #{tpu_custom_call.1} parent=1 // pred_region
      %v1827 = vld [vmem:[#allocation3] sm:$0xff]
      %v1828 = vld [vmem:[#allocation3 + $0x8] sm:$0x3]
      %v1829 = vld [vmem:[#allocation4] sm:$0xff]
      %v1830 = vld [vmem:[#allocation4 + $0x8] sm:$0x3]
      %vm1831 = vcmask 1041408
      %v1832 = vsel %vm1831, %v1828, -inf
      %v1833 = vmax.f32 %v1827, %v1832
      %v1834 = vrot.slane %v1833, 4
      %v1835 = vmax.f32 %v1833, %v1834
      %v1836 = vrot.slane %v1835, 2
      %v1837 = vmax.f32 %v1835, %v1836
      %v1838 = vrot.slane %v1837, 1
      %v1839 = vmax.f32 %v1837, %v1838
      %v1840 = vsub.f32 %v1827, %v1839
      %v1841 = vsub.f32 %v1828, %v1839
      %v1842 = vmul.f32 %v1840, 1.442695
      %v1843 = vpow.pop %v1842
      %v1844 = vmul.f32 %v1841, 1.442695
      %v1845 = vpow.pop %v1844
      %v1846 = vsel %vm1831, %v1845, 0.0
      %v1847 = vadd.f32 %v1843, %v1846
      %v1848 = vrot.slane %v1847, 4
      %v1849 = vadd.f32 %v1847, %v1848
      %v1850 = vrot.slane %v1849, 2
      %v1851 = vadd.f32 %v1849, %v1850
      %v1852 = vrot.slane %v1851, 1
      %v1853 = vadd.f32 %v1851, %v1852
      %v1854 = vrcp.pop %v1853
      %v1855 = vmul.f32 %v1843, %v1854
      %v1856 = vmul.f32 %v1845, %v1854
      %1857 = vst [vmem:[#allocation5] sm:$0xff] %v1855
      %1858 = vst [vmem:[#allocation5 + $0x8] sm:$0x3] %v1856
      %v1859 = vcvt.f32.s32.to.zero.pseudo %v1829
      %v1860 = vcvt.f32.s32.to.zero.pseudo %v1830
      %1861 = vst [vmem:[#allocation7] sm:$0xff] %v1859
      %1862 = vst [vmem:[#allocation7 + $0x8] sm:$0x3] %v1860
    $region17: #{tpu_custom_call.1} parent=1 // pred_fallthru
      _
    // Predicated region
    $region18: #{tpu_custom_call.1} parent=1 // pred_check
      _
    $region19: #{tpu_custom_call.1} parent=1 // pred_check_branch
      %1864 = sbr.rel (0) target = $region21
    $region20: #{tpu_custom_call.1} parent=1 // pred_region
      %s1866 = ssub.s32 256, 256
      %1867 = vsyncadd [#allocation6], %s1866
      %s1868 = sshll.u32 [#allocation5], 4
      %s1869 = int_to_ptr.vmem [resolvable:$true] %s1868
      %1874 = dma.vmem_to_hbm [thread:$0]  %s1869, 256, %s2, [#allocation6], 128, 128, 8
    $region21: #{tpu_custom_call.1} parent=1 // pred_fallthru
      _
    // Predicated region
    $region22: #{tpu_custom_call.1} parent=1 // pred_check
      _
    $region23: #{tpu_custom_call.1} parent=1 // pred_check_branch
      %1876 = sbr.rel (0) target = $region25
    $region24: #{tpu_custom_call.1} parent=1 // pred_region
      %s1878 = ssub.s32 256, 256
      %1879 = vsyncadd [#allocation8], %s1878
      %s1880 = sshll.u32 [#allocation7], 4
      %s1881 = int_to_ptr.vmem [resolvable:$true] %s1880
      %1886 = dma.vmem_to_hbm [thread:$0]  %s1881, 256, %s3, [#allocation8], 128, 128, 8
    $region25: #{tpu_custom_call.1} parent=1 // pred_fallthru
      _
    // Predicated region
    $region26: #{tpu_custom_call.1} parent=1 // pred_check
      _
    $region27: #{tpu_custom_call.1} parent=1 // pred_check_branch
      %1888 = sbr.rel (0) target = $region29
    $region28: #{tpu_custom_call.1} parent=1 // pred_region
      %1889 = dma.done [#allocation6], 256
    $region29: #{tpu_custom_call.1} parent=1 // pred_fallthru
      _
    // Predicated region
    $region30: #{tpu_custom_call.1} parent=1 // pred_check
      _
    $region31: #{tpu_custom_call.1} parent=1 // pred_check_branch
      %1891 = sbr.rel (0) target = $region33
    $region32: #{tpu_custom_call.1} parent=1 // pred_region
      %1892 = dma.done [#allocation8], 256
    $region33: #{tpu_custom_call.1} parent=1 // pred_fallthru
      _
    %1893 = vsyncpa [#allocation6], 1
    %1894 = vsyncpa [#allocation8], 1

</llo_original>
